<compile_context>
chip_gen: v7x
topology: tpu7x:2x2x1
jax: 0.10.0
libtpu: 0.0.40
codegen_flags: <defaults>
</compile_context>

<pallas_src>
import math

import jax
import jax.numpy as jnp
from jax.experimental import pallas as pl
from jax.experimental.pallas import tpu as pltpu

# ---- static model config (small, consistent with the module) ----
D_MODEL = 32
NHEAD = 4
D_K = D_MODEL // NHEAD
CONSTANT_HEAD = 1           # 0 < constant_head <= nhead exercises the constant_scores path
DIM_FF = 64
SEQ = 8
BS = 2
EPS = 1e-5                  # nn.LayerNorm default

# packed parameter-slab layout (all offsets static and lane-tile aligned)
_W_SLAB_COLS = 3 * 128      # wqkv @ cols [0:96], wo @ [128:160], w1 @ [256:320]
_VEC_ROWS = 16              # rows 0..7: biases + LN params; rows 8..: constant scores
assert 8 + CONSTANT_HEAD * SEQ <= _VEC_ROWS


def _layer_norm(x, gamma, beta):
    mu = jnp.mean(x, axis=-1, keepdims=True)
    var = jnp.mean((x - mu) ** 2, axis=-1, keepdims=True)
    return (x - mu) * jax.lax.rsqrt(var + EPS) * gamma + beta


def encoder_layer_kernel(src_ref, wslab_ref, w2_ref, vec_ref, out_ref, attn_ref):
    x = src_ref[...]                                     # (BS*SEQ, D_MODEL)

    # --- unpack parameters (static, lane-tile-aligned slices of packed slabs) ---
    wqkv = wslab_ref[:, 0:3 * D_MODEL]                   # (32, 96)
    wo = wslab_ref[:, 128:128 + D_MODEL]                 # (32, 32)
    w1 = wslab_ref[:, 256:256 + DIM_FF]                  # (32, 64)
    w2 = w2_ref[...]                                     # (64, 32)

    bqkv = vec_ref[0:1, 0:3 * D_MODEL]                   # (1, 96)
    bo = vec_ref[1:2, 0:D_MODEL]
    b1 = vec_ref[2:3, 0:DIM_FF]
    b2 = vec_ref[3:4, 0:D_MODEL]
    ln1g = vec_ref[4:5, 0:D_MODEL]
    ln1b = vec_ref[5:6, 0:D_MODEL]
    ln2g = vec_ref[6:7, 0:D_MODEL]
    ln2b = vec_ref[7:8, 0:D_MODEL]

    # --- fused Q/K/V projection: one MXU push over all BS*SEQ rows ---
    qkv = jnp.dot(x, wqkv, preferred_element_type=jnp.float32) + bqkv   # (16, 96)
    q3 = qkv[:, 0:D_MODEL].reshape(BS, SEQ, D_MODEL)
    k3 = qkv[:, D_MODEL:2 * D_MODEL].reshape(BS, SEQ, D_MODEL)
    v3 = qkv[:, 2 * D_MODEL:3 * D_MODEL].reshape(BS, SEQ, D_MODEL)

    # --- stack heads along the (major) batch axis: stacked index = head*BS + batch ---
    def head_stack(t3, h_lo, h_hi):
        return jnp.concatenate(
            [t3[:, :, h * D_K:(h + 1) * D_K] for h in range(h_lo, h_hi)], axis=0)

    q_dot = head_stack(q3, CONSTANT_HEAD, NHEAD)         # ((NHEAD-CH)*BS, SEQ, D_K)
    k_dot = head_stack(k3, CONSTANT_HEAD, NHEAD)
    v_all = head_stack(v3, 0, NHEAD)                     # (NHEAD*BS, SEQ, D_K)

    # --- scores: one batched einsum for all dot-product heads + constant heads ---
    inv_sqrt_dk = 1.0 / math.sqrt(D_K)
    s_dot = jnp.einsum('bqd,bkd->bqk', q_dot, k_dot,
                       preferred_element_type=jnp.float32) * inv_sqrt_dk
    s_const = [jnp.broadcast_to(
        vec_ref[8 + h * SEQ:8 + (h + 1) * SEQ, 0:SEQ][None], (BS, SEQ, SEQ))
        for h in range(CONSTANT_HEAD)]
    scores = jnp.concatenate(s_const + [s_dot], axis=0)  # (NHEAD*BS, SEQ, SEQ)

    # --- one softmax over all heads (last dim) ---
    m = jnp.max(scores, axis=-1, keepdims=True)
    e = jnp.exp(scores - m)
    attn = e / jnp.sum(e, axis=-1, keepdims=True)

    # single store of attention weights (head-major / batch-minor; wrapper reorders)
    attn_ref[...] = attn.reshape(NHEAD, BS, SEQ, SEQ)

    # --- attention output: one batched attn @ V einsum over all heads ---
    res = jnp.einsum('bqk,bkd->bqd', attn, v_all,
                     preferred_element_type=jnp.float32)  # (NHEAD*BS, SEQ, D_K)

    # head -> d_model recombination folded into the output projection:
    #   concat_h(res_h) @ wo  ==  sum_h  res_h @ wo[h*D_K:(h+1)*D_K, :]
    attn_out = None
    for h in range(NHEAD):
        res_h = res[h * BS:(h + 1) * BS].reshape(BS * SEQ, D_K)
        part = jnp.dot(res_h, wo[h * D_K:(h + 1) * D_K, :],
                       preferred_element_type=jnp.float32)
        attn_out = part if attn_out is None else attn_out + part
    attn_out = attn_out + bo

    # --- residual + LayerNorm 1 (dropout1 = identity) ---
    y = _layer_norm(x + attn_out, ln1g, ln1b)

    # --- feed-forward: linear1 -> relu -> (dropout = id) -> linear2 ---
    h1 = jnp.maximum(jnp.dot(y, w1, preferred_element_type=jnp.float32) + b1, 0.0)
    ff = jnp.dot(h1, w2, preferred_element_type=jnp.float32) + b2

    # --- residual + LayerNorm 2 (dropout2 = identity), single whole-tile store ---
    out_ref[...] = _layer_norm(y + ff, ln2g, ln2b)


@jax.jit
def transformer_encoder_layer(src_sbd, params):
    """src_sbd: (seq, bs, d_model) float32 (PyTorch batch_first=False layout)."""
    (wq, bq, wk, bk, wv, bv, wo, bo, cs,
     ln1g, ln1b, ln2g, ln2b, w1, b1, w2, b2) = params
    seq, bs, d = src_sbd.shape
    assert (seq, bs, d) == (SEQ, BS, D_MODEL)

    # fold (seq, bs) -> rows once at the boundary: (bs*seq, d_model)
    x2d = jnp.transpose(src_sbd, (1, 0, 2)).reshape(BS * SEQ, D_MODEL)

    # ---- pack the 17 parameter tensors into 3 slabs (3 input DMAs, aligned offsets) ----
    wslab = jnp.zeros((D_MODEL, _W_SLAB_COLS), jnp.float32)
    wslab = wslab.at[:, 0:3 * D_MODEL].set(jnp.concatenate([wq, wk, wv], axis=1))
    wslab = wslab.at[:, 128:128 + D_MODEL].set(wo)
    wslab = wslab.at[:, 256:256 + DIM_FF].set(w1)

    vecs = jnp.zeros((_VEC_ROWS, 128), jnp.float32)
    vecs = vecs.at[0, 0:3 * D_MODEL].set(jnp.concatenate([bq, bk, bv]))
    vecs = vecs.at[1, 0:D_MODEL].set(bo)
    vecs = vecs.at[2, 0:DIM_FF].set(b1)
    vecs = vecs.at[3, 0:D_MODEL].set(b2)
    vecs = vecs.at[4, 0:D_MODEL].set(ln1g)
    vecs = vecs.at[5, 0:D_MODEL].set(ln1b)
    vecs = vecs.at[6, 0:D_MODEL].set(ln2g)
    vecs = vecs.at[7, 0:D_MODEL].set(ln2b)
    vecs = vecs.at[8:8 + CONSTANT_HEAD * SEQ, 0:SEQ].set(
        cs.reshape(CONSTANT_HEAD * SEQ, SEQ))

    def full_spec(shape):
        nd = len(shape)
        return pl.BlockSpec(shape, lambda i, _nd=nd: (0,) * _nd)

    out2d, attn_hb = pl.pallas_call(
        encoder_layer_kernel,
        out_shape=[
            jax.ShapeDtypeStruct((BS * SEQ, D_MODEL), jnp.float32),
            jax.ShapeDtypeStruct((NHEAD, BS, SEQ, SEQ), jnp.float32),
        ],
        grid=(1,),   # single step: whole problem is one VMEM-resident tile
        in_specs=[
            full_spec((BS * SEQ, D_MODEL)),
            full_spec((D_MODEL, _W_SLAB_COLS)),
            full_spec((DIM_FF, D_MODEL)),
            full_spec((_VEC_ROWS, 128)),
        ],
        out_specs=[
            full_spec((BS * SEQ, D_MODEL)),
            full_spec((NHEAD, BS, SEQ, SEQ)),
        ],
        compiler_params=pltpu.CompilerParams(dimension_semantics=("arbitrary",)),
    )(x2d, wslab, w2, vecs)

    # back to PyTorch conventions (tiny XLA reorders, fused into this jit)
    out = jnp.transpose(out2d.reshape(BS, SEQ, D_MODEL), (1, 0, 2))   # (seq, bs, d)
    attn = jnp.transpose(attn_hb, (1, 0, 2, 3))                       # (bs, nhead, seq, seq)
    return out, attn


def _reference(src_sbd, params):
    """Pure-JAX reference with identical semantics (dropout = identity)."""
    (wq, bq, wk, bk, wv, bv, wo, bo, cs,
     ln1g, ln1b, ln2g, ln2b, w1, b1, w2, b2) = params
    x = jnp.transpose(src_sbd, (1, 0, 2))            # (bs, seq, d)
    q = x @ wq + bq
    k = x @ wk + bk
    v = x @ wv + bv

    def split_heads(t):                              # (bs, nhead, seq, d_k)
        return t.reshape(BS, SEQ, NHEAD, D_K).transpose(0, 2, 1, 3)

    qh, kh, vh = split_heads(q), split_heads(k), split_heads(v)
    dot = jnp.einsum('bhqd,bhkd->bhqk', qh[:, CONSTANT_HEAD:],
                     kh[:, CONSTANT_HEAD:]) / math.sqrt(D_K)
    const = jnp.broadcast_to(cs[None], (BS, CONSTANT_HEAD, SEQ, SEQ))
    scores = jax.nn.softmax(jnp.concatenate([const, dot], axis=1), axis=-1)
    res = jnp.einsum('bhqk,bhkd->bhqd', scores, vh)
    res = res.transpose(0, 2, 1, 3).reshape(BS, SEQ, D_MODEL)
    res = res @ wo + bo

    y = _layer_norm(x + res, ln1g, ln1b)
    ff = jnp.maximum(y @ w1 + b1, 0.0) @ w2 + b2
    out = _layer_norm(y + ff, ln2g, ln2b)
    return jnp.transpose(out, (1, 0, 2)), scores


def init_params(key):
    ks = jax.random.split(key, 16)
    s = 0.1

    def lin(kw, kb, din, dout):
        w = jax.random.normal(kw, (din, dout), jnp.float32) * s
        b = jax.random.normal(kb, (dout,), jnp.float32) * s
        return w, b

    wq, bq = lin(ks[0], ks[1], D_MODEL, D_MODEL)
    wk, bk = lin(ks[2], ks[3], D_MODEL, D_MODEL)
    wv, bv = lin(ks[4], ks[5], D_MODEL, D_MODEL)
    wo, bo = lin(ks[6], ks[7], D_MODEL, D_MODEL)
    cs = jax.random.uniform(ks[8], (CONSTANT_HEAD, SEQ, SEQ), jnp.float32)
    ln1g = jnp.ones((D_MODEL,), jnp.float32)
    ln1b = jnp.zeros((D_MODEL,), jnp.float32)
    ln2g = jnp.ones((D_MODEL,), jnp.float32)
    ln2b = jnp.zeros((D_MODEL,), jnp.float32)
    w1, b1 = lin(ks[9], ks[10], D_MODEL, DIM_FF)
    w2, b2 = lin(ks[11], ks[12], DIM_FF, D_MODEL)
    return (wq, bq, wk, bk, wv, bv, wo, bo, cs,
            ln1g, ln1b, ln2g, ln2b, w1, b1, w2, b2)


if __name__ == "__main__":
    key = jax.random.PRNGKey(0)
    k_src, k_par = jax.random.split(key)
    src = jax.random.normal(k_src, (SEQ, BS, D_MODEL), jnp.float32)  # (seq, bs, d_model)
    params = init_params(k_par)

    out, attn = transformer_encoder_layer(src, params)
    out = jax.block_until_ready(out)
    attn = jax.block_until_ready(attn)

    ref_out, ref_attn = _reference(src, params)
    assert out.shape == (SEQ, BS, D_MODEL)
    assert attn.shape == (BS, NHEAD, SEQ, SEQ)
    assert jnp.allclose(out, ref_out, atol=1e-3, rtol=1e-3), \
        float(jnp.max(jnp.abs(out - ref_out)))
    assert jnp.allclose(attn, ref_attn, atol=1e-3, rtol=1e-3), \
        float(jnp.max(jnp.abs(attn - ref_attn)))

    print("KERNEL_OK")
</pallas_src>

<mosaic_0001>
module attributes {stable_mosaic.version = 11 : i64} {
  func.func @encoder_layer_kernel(%arg0: i32, %arg1: memref<16x32xf32, #tpu.memory_space<vmem>>, %arg2: memref<32x384xf32, #tpu.memory_space<vmem>>, %arg3: memref<64x32xf32, #tpu.memory_space<vmem>>, %arg4: memref<16x128xf32, #tpu.memory_space<vmem>>, %arg5: memref<16x32xf32, #tpu.memory_space<vmem>>, %arg6: memref<4x2x8x8xf32, #tpu.memory_space<vmem>>) attributes {dimension_semantics = [#tpu.dimension_semantics<arbitrary>], iteration_bounds = array<i64: 1>, scalar_prefetch = 0 : i64, scratch_operands = 0 : i64, tpu.core_type = #tpu.core_type<tc>, window_params = [{pipeline_mode = #tpu.pipeline_mode<synchronous>, transform_indices = @transform_0, window_bounds = array<i64: 16, 32>}, {pipeline_mode = #tpu.pipeline_mode<synchronous>, transform_indices = @transform_1, window_bounds = array<i64: 32, 384>}, {pipeline_mode = #tpu.pipeline_mode<synchronous>, transform_indices = @transform_2, window_bounds = array<i64: 64, 32>}, {pipeline_mode = #tpu.pipeline_mode<synchronous>, transform_indices = @transform_3, window_bounds = array<i64: 16, 128>}, {pipeline_mode = #tpu.pipeline_mode<synchronous>, transform_indices = @transform_4, window_bounds = array<i64: 16, 32>}, {pipeline_mode = #tpu.pipeline_mode<synchronous>, transform_indices = @transform_5, window_bounds = array<i64: 4, 2, 8, 8>}]} {
    %c0 = arith.constant 0 : index
    %c0_0 = arith.constant 0 : index
    %0 = vector.load %arg1[%c0, %c0_0] : memref<16x32xf32, #tpu.memory_space<vmem>>, vector<16x32xf32>
    %c0_1 = arith.constant 0 : index
    %c0_2 = arith.constant 0 : index
    %1 = vector.load %arg2[%c0_1, %c0_2] : memref<32x384xf32, #tpu.memory_space<vmem>>, vector<32x96xf32>
    %c0_3 = arith.constant 0 : index
    %c128 = arith.constant 128 : index
    %2 = vector.load %arg2[%c0_3, %c128] : memref<32x384xf32, #tpu.memory_space<vmem>>, vector<32x32xf32>
    %c0_4 = arith.constant 0 : index
    %c256 = arith.constant 256 : index
    %3 = vector.load %arg2[%c0_4, %c256] : memref<32x384xf32, #tpu.memory_space<vmem>>, vector<32x64xf32>
    %c0_5 = arith.constant 0 : index
    %c0_6 = arith.constant 0 : index
    %4 = vector.load %arg3[%c0_5, %c0_6] : memref<64x32xf32, #tpu.memory_space<vmem>>, vector<64x32xf32>
    %c0_7 = arith.constant 0 : index
    %c0_8 = arith.constant 0 : index
    %5 = vector.load %arg4[%c0_7, %c0_8] : memref<16x128xf32, #tpu.memory_space<vmem>>, vector<1x96xf32>
    %c1 = arith.constant 1 : index
    %c0_9 = arith.constant 0 : index
    %6 = vector.load %arg4[%c1, %c0_9] : memref<16x128xf32, #tpu.memory_space<vmem>>, vector<1x32xf32>
    %c2 = arith.constant 2 : index
    %c0_10 = arith.constant 0 : index
    %7 = vector.load %arg4[%c2, %c0_10] : memref<16x128xf32, #tpu.memory_space<vmem>>, vector<1x64xf32>
    %c3 = arith.constant 3 : index
    %c0_11 = arith.constant 0 : index
    %8 = vector.load %arg4[%c3, %c0_11] : memref<16x128xf32, #tpu.memory_space<vmem>>, vector<1x32xf32>
    %c4 = arith.constant 4 : index
    %c0_12 = arith.constant 0 : index
    %9 = vector.load %arg4[%c4, %c0_12] : memref<16x128xf32, #tpu.memory_space<vmem>>, vector<1x32xf32>
    %c5 = arith.constant 5 : index
    %c0_13 = arith.constant 0 : index
    %10 = vector.load %arg4[%c5, %c0_13] : memref<16x128xf32, #tpu.memory_space<vmem>>, vector<1x32xf32>
    %c6 = arith.constant 6 : index
    %c0_14 = arith.constant 0 : index
    %11 = vector.load %arg4[%c6, %c0_14] : memref<16x128xf32, #tpu.memory_space<vmem>>, vector<1x32xf32>
    %c7 = arith.constant 7 : index
    %c0_15 = arith.constant 0 : index
    %12 = vector.load %arg4[%c7, %c0_15] : memref<16x128xf32, #tpu.memory_space<vmem>>, vector<1x32xf32>
    %cst = arith.constant dense<0.000000e+00> : vector<16x96xf32>
    %13 = tpu.matmul %0, %1, %cst {dimension_numbers = #tpu.dot_dimension_numbers<[1], [0], [0], [1], [0, 0, 1, 1], [], []>} : vector<16x32xf32>, vector<32x96xf32>, vector<16x96xf32> -> vector<16x96xf32>
    %14 = vector.broadcast %5 : vector<1x96xf32> to vector<16x96xf32>
    %15 = arith.addf %13, %14 : vector<16x96xf32>
    %16 = vector.extract_strided_slice %15 {offsets = [0, 0], sizes = [16, 32], strides = [1, 1]} : vector<16x96xf32> to vector<16x32xf32>
    %17 = vector.shape_cast %16 : vector<16x32xf32> to vector<2x8x32xf32>
    %18 = vector.extract_strided_slice %15 {offsets = [0, 32], sizes = [16, 32], strides = [1, 1]} : vector<16x96xf32> to vector<16x32xf32>
    %19 = vector.shape_cast %18 : vector<16x32xf32> to vector<2x8x32xf32>
    %20 = vector.extract_strided_slice %15 {offsets = [0, 64], sizes = [16, 32], strides = [1, 1]} : vector<16x96xf32> to vector<16x32xf32>
    %21 = vector.shape_cast %20 : vector<16x32xf32> to vector<2x8x32xf32>
    %22 = vector.extract_strided_slice %17 {offsets = [0, 0, 8], sizes = [2, 8, 8], strides = [1, 1, 1]} : vector<2x8x32xf32> to vector<2x8x8xf32>
    %23 = vector.extract_strided_slice %17 {offsets = [0, 0, 16], sizes = [2, 8, 8], strides = [1, 1, 1]} : vector<2x8x32xf32> to vector<2x8x8xf32>
    %24 = vector.extract_strided_slice %17 {offsets = [0, 0, 24], sizes = [2, 8, 8], strides = [1, 1, 1]} : vector<2x8x32xf32> to vector<2x8x8xf32>
    %25 = tpu.concatenate %22, %23, %24 in 0 : vector<2x8x8xf32>, vector<2x8x8xf32>, vector<2x8x8xf32> -> vector<6x8x8xf32>
    %26 = vector.extract_strided_slice %19 {offsets = [0, 0, 8], sizes = [2, 8, 8], strides = [1, 1, 1]} : vector<2x8x32xf32> to vector<2x8x8xf32>
    %27 = vector.extract_strided_slice %19 {offsets = [0, 0, 16], sizes = [2, 8, 8], strides = [1, 1, 1]} : vector<2x8x32xf32> to vector<2x8x8xf32>
    %28 = vector.extract_strided_slice %19 {offsets = [0, 0, 24], sizes = [2, 8, 8], strides = [1, 1, 1]} : vector<2x8x32xf32> to vector<2x8x8xf32>
    %29 = tpu.concatenate %26, %27, %28 in 0 : vector<2x8x8xf32>, vector<2x8x8xf32>, vector<2x8x8xf32> -> vector<6x8x8xf32>
    %30 = vector.extract_strided_slice %21 {offsets = [0, 0, 0], sizes = [2, 8, 8], strides = [1, 1, 1]} : vector<2x8x32xf32> to vector<2x8x8xf32>
    %31 = vector.extract_strided_slice %21 {offsets = [0, 0, 8], sizes = [2, 8, 8], strides = [1, 1, 1]} : vector<2x8x32xf32> to vector<2x8x8xf32>
    %32 = vector.extract_strided_slice %21 {offsets = [0, 0, 16], sizes = [2, 8, 8], strides = [1, 1, 1]} : vector<2x8x32xf32> to vector<2x8x8xf32>
    %33 = vector.extract_strided_slice %21 {offsets = [0, 0, 24], sizes = [2, 8, 8], strides = [1, 1, 1]} : vector<2x8x32xf32> to vector<2x8x8xf32>
    %34 = tpu.concatenate %30, %31, %32, %33 in 0 : vector<2x8x8xf32>, vector<2x8x8xf32>, vector<2x8x8xf32>, vector<2x8x8xf32> -> vector<8x8x8xf32>
    "tpu.trace_start"() <{level = 10 : i32, message = "bqd,bkd->bqk"}> : () -> ()
    %cst_16 = arith.constant dense<0.000000e+00> : vector<6x8x8xf32>
    %35 = tpu.matmul %25, %29, %cst_16 {dimension_numbers = #tpu.dot_dimension_numbers<[2], [2], [1], [1], [0, 0, 0, 1, 1, 1], [0], [0]>} : vector<6x8x8xf32>, vector<6x8x8xf32>, vector<6x8x8xf32> -> vector<6x8x8xf32>
    "tpu.trace_stop"() : () -> ()
    %cst_17 = arith.constant 0.353553385 : f32
    %36 = vector.broadcast %cst_17 : f32 to vector<6x8x8xf32>
    %37 = arith.mulf %35, %36 : vector<6x8x8xf32>
    %c8 = arith.constant 8 : index
    %c0_18 = arith.constant 0 : index
    %38 = vector.load %arg4[%c8, %c0_18] : memref<16x128xf32, #tpu.memory_space<vmem>>, vector<8x8xf32>
    %39 = vector.shape_cast %38 : vector<8x8xf32> to vector<1x8x8xf32>
    %40 = vector.shape_cast %39 : vector<1x8x8xf32> to vector<1x8x8xf32>
    %41 = vector.broadcast %40 : vector<1x8x8xf32> to vector<2x8x8xf32>
    %42 = tpu.concatenate %41, %37 in 0 : vector<2x8x8xf32>, vector<6x8x8xf32> -> vector<8x8x8xf32>
    %cst_19 = arith.constant dense<0xFF800000> : vector<8x8xf32>
    %43 = vector.multi_reduction <maximumf>, %42, %cst_19 [2] : vector<8x8x8xf32> to vector<8x8xf32>
    %44 = vector.shape_cast %43 : vector<8x8xf32> to vector<8x8x1xf32>
    %45 = vector.broadcast %44 : vector<8x8x1xf32> to vector<8x8x8xf32>
    %46 = arith.subf %42, %45 : vector<8x8x8xf32>
    %47 = math.exp %46 : vector<8x8x8xf32>
    %cst_20 = arith.constant dense<0.000000e+00> : vector<8x8xf32>
    %48 = vector.multi_reduction <add>, %47, %cst_20 [2] : vector<8x8x8xf32> to vector<8x8xf32>
    %49 = vector.shape_cast %48 : vector<8x8xf32> to vector<8x8x1xf32>
    %50 = vector.broadcast %49 : vector<8x8x1xf32> to vector<8x8x8xf32>
    %51 = arith.divf %47, %50 : vector<8x8x8xf32>
    %52 = vector.shape_cast %51 : vector<8x8x8xf32> to vector<4x2x8x8xf32>
    %c0_21 = arith.constant 0 : index
    %c0_22 = arith.constant 0 : index
    %c0_23 = arith.constant 0 : index
    %c0_24 = arith.constant 0 : index
    %53 = vector.load %arg6[%c0_21, %c0_22, %c0_23, %c0_24] : memref<4x2x8x8xf32, #tpu.memory_space<vmem>>, vector<4x2x8x8xf32>
    tpu.vector_store %arg6[%c0_21, %c0_22, %c0_23, %c0_24], %52 {strides = array<i32>} : memref<4x2x8x8xf32, #tpu.memory_space<vmem>>, vector<4x2x8x8xf32>,
    "tpu.trace_start"() <{level = 10 : i32, message = "bqk,bkd->bqd"}> : () -> ()
    %cst_25 = arith.constant dense<0.000000e+00> : vector<8x8x8xf32>
    %54 = tpu.matmul %51, %34, %cst_25 {dimension_numbers = #tpu.dot_dimension_numbers<[2], [1], [1], [2], [0, 0, 0, 1, 1, 2], [0], [0]>} : vector<8x8x8xf32>, vector<8x8x8xf32>, vector<8x8x8xf32> -> vector<8x8x8xf32>
    "tpu.trace_stop"() : () -> ()
    %55 = vector.extract_strided_slice %54 {offsets = [0, 0, 0], sizes = [2, 8, 8], strides = [1, 1, 1]} : vector<8x8x8xf32> to vector<2x8x8xf32>
    %56 = vector.shape_cast %55 : vector<2x8x8xf32> to vector<16x8xf32>
    %57 = vector.extract_strided_slice %2 {offsets = [0, 0], sizes = [8, 32], strides = [1, 1]} : vector<32x32xf32> to vector<8x32xf32>
    %cst_26 = arith.constant dense<0.000000e+00> : vector<16x32xf32>
    %58 = tpu.matmul %56, %57, %cst_26 {dimension_numbers = #tpu.dot_dimension_numbers<[1], [0], [0], [1], [0, 0, 1, 1], [], []>} : vector<16x8xf32>, vector<8x32xf32>, vector<16x32xf32> -> vector<16x32xf32>
    %59 = vector.extract_strided_slice %54 {offsets = [2, 0, 0], sizes = [2, 8, 8], strides = [1, 1, 1]} : vector<8x8x8xf32> to vector<2x8x8xf32>
    %60 = vector.shape_cast %59 : vector<2x8x8xf32> to vector<16x8xf32>
    %61 = vector.extract_strided_slice %2 {offsets = [8, 0], sizes = [8, 32], strides = [1, 1]} : vector<32x32xf32> to vector<8x32xf32>
    %cst_27 = arith.constant dense<0.000000e+00> : vector<16x32xf32>
    %62 = tpu.matmul %60, %61, %cst_27 {dimension_numbers = #tpu.dot_dimension_numbers<[1], [0], [0], [1], [0, 0, 1, 1], [], []>} : vector<16x8xf32>, vector<8x32xf32>, vector<16x32xf32> -> vector<16x32xf32>
    %63 = arith.addf %58, %62 : vector<16x32xf32>
    %64 = vector.extract_strided_slice %54 {offsets = [4, 0, 0], sizes = [2, 8, 8], strides = [1, 1, 1]} : vector<8x8x8xf32> to vector<2x8x8xf32>
    %65 = vector.shape_cast %64 : vector<2x8x8xf32> to vector<16x8xf32>
    %66 = vector.extract_strided_slice %2 {offsets = [16, 0], sizes = [8, 32], strides = [1, 1]} : vector<32x32xf32> to vector<8x32xf32>
    %cst_28 = arith.constant dense<0.000000e+00> : vector<16x32xf32>
    %67 = tpu.matmul %65, %66, %cst_28 {dimension_numbers = #tpu.dot_dimension_numbers<[1], [0], [0], [1], [0, 0, 1, 1], [], []>} : vector<16x8xf32>, vector<8x32xf32>, vector<16x32xf32> -> vector<16x32xf32>
    %68 = arith.addf %63, %67 : vector<16x32xf32>
    %69 = vector.extract_strided_slice %54 {offsets = [6, 0, 0], sizes = [2, 8, 8], strides = [1, 1, 1]} : vector<8x8x8xf32> to vector<2x8x8xf32>
    %70 = vector.shape_cast %69 : vector<2x8x8xf32> to vector<16x8xf32>
    %71 = vector.extract_strided_slice %2 {offsets = [24, 0], sizes = [8, 32], strides = [1, 1]} : vector<32x32xf32> to vector<8x32xf32>
    %cst_29 = arith.constant dense<0.000000e+00> : vector<16x32xf32>
    %72 = tpu.matmul %70, %71, %cst_29 {dimension_numbers = #tpu.dot_dimension_numbers<[1], [0], [0], [1], [0, 0, 1, 1], [], []>} : vector<16x8xf32>, vector<8x32xf32>, vector<16x32xf32> -> vector<16x32xf32>
    %73 = arith.addf %68, %72 : vector<16x32xf32>
    %74 = vector.broadcast %6 : vector<1x32xf32> to vector<16x32xf32>
    %75 = arith.addf %73, %74 : vector<16x32xf32>
    %76 = arith.addf %0, %75 : vector<16x32xf32>
    %cst_30 = arith.constant dense<0.000000e+00> : vector<16xf32>
    %77 = vector.multi_reduction <add>, %76, %cst_30 [1] : vector<16x32xf32> to vector<16xf32>
    %78 = vector.shape_cast %77 : vector<16xf32> to vector<16x1xf32>
    %cst_31 = arith.constant 3.200000e+01 : f32
    %79 = vector.broadcast %cst_31 : f32 to vector<16x1xf32>
    %80 = arith.divf %78, %79 : vector<16x1xf32>
    %81 = vector.broadcast %80 : vector<16x1xf32> to vector<16x32xf32>
    %82 = arith.subf %76, %81 : vector<16x32xf32>
    %83 = arith.mulf %82, %82 : vector<16x32xf32>
    %cst_32 = arith.constant dense<0.000000e+00> : vector<16xf32>
    %84 = vector.multi_reduction <add>, %83, %cst_32 [1] : vector<16x32xf32> to vector<16xf32>
    %85 = vector.shape_cast %84 : vector<16xf32> to vector<16x1xf32>
    %cst_33 = arith.constant 3.200000e+01 : f32
    %86 = vector.broadcast %cst_33 : f32 to vector<16x1xf32>
    %87 = arith.divf %85, %86 : vector<16x1xf32>
    %88 = vector.broadcast %80 : vector<16x1xf32> to vector<16x32xf32>
    %89 = arith.subf %76, %88 : vector<16x32xf32>
    %cst_34 = arith.constant 9.99999974E-6 : f32
    %90 = vector.broadcast %cst_34 : f32 to vector<16x1xf32>
    %91 = arith.addf %87, %90 : vector<16x1xf32>
    %92 = math.rsqrt %91 : vector<16x1xf32>
    %93 = vector.broadcast %92 : vector<16x1xf32> to vector<16x32xf32>
    %94 = arith.mulf %89, %93 : vector<16x32xf32>
    %95 = vector.broadcast %9 : vector<1x32xf32> to vector<16x32xf32>
    %96 = arith.mulf %94, %95 : vector<16x32xf32>
    %97 = vector.broadcast %10 : vector<1x32xf32> to vector<16x32xf32>
    %98 = arith.addf %96, %97 : vector<16x32xf32>
    %cst_35 = arith.constant dense<0.000000e+00> : vector<16x64xf32>
    %99 = tpu.matmul %98, %3, %cst_35 {dimension_numbers = #tpu.dot_dimension_numbers<[1], [0], [0], [1], [0, 0, 1, 1], [], []>} : vector<16x32xf32>, vector<32x64xf32>, vector<16x64xf32> -> vector<16x64xf32>
    %100 = vector.broadcast %7 : vector<1x64xf32> to vector<16x64xf32>
    %101 = arith.addf %99, %100 : vector<16x64xf32>
    %cst_36 = arith.constant 0.000000e+00 : f32
    %102 = vector.broadcast %cst_36 : f32 to vector<16x64xf32>
    %103 = arith.maximumf %101, %102 : vector<16x64xf32>
    %cst_37 = arith.constant dense<0.000000e+00> : vector<16x32xf32>
    %104 = tpu.matmul %103, %4, %cst_37 {dimension_numbers = #tpu.dot_dimension_numbers<[1], [0], [0], [1], [0, 0, 1, 1], [], []>} : vector<16x64xf32>, vector<64x32xf32>, vector<16x32xf32> -> vector<16x32xf32>
    %105 = vector.broadcast %8 : vector<1x32xf32> to vector<16x32xf32>
    %106 = arith.addf %104, %105 : vector<16x32xf32>
    %107 = arith.addf %98, %106 : vector<16x32xf32>
    %cst_38 = arith.constant dense<0.000000e+00> : vector<16xf32>
    %108 = vector.multi_reduction <add>, %107, %cst_38 [1] : vector<16x32xf32> to vector<16xf32>
    %109 = vector.shape_cast %108 : vector<16xf32> to vector<16x1xf32>
    %cst_39 = arith.constant 3.200000e+01 : f32
    %110 = vector.broadcast %cst_39 : f32 to vector<16x1xf32>
    %111 = arith.divf %109, %110 : vector<16x1xf32>
    %112 = vector.broadcast %111 : vector<16x1xf32> to vector<16x32xf32>
    %113 = arith.subf %107, %112 : vector<16x32xf32>
    %114 = arith.mulf %113, %113 : vector<16x32xf32>
    %cst_40 = arith.constant dense<0.000000e+00> : vector<16xf32>
    %115 = vector.multi_reduction <add>, %114, %cst_40 [1] : vector<16x32xf32> to vector<16xf32>
    %116 = vector.shape_cast %115 : vector<16xf32> to vector<16x1xf32>
    %cst_41 = arith.constant 3.200000e+01 : f32
    %117 = vector.broadcast %cst_41 : f32 to vector<16x1xf32>
    %118 = arith.divf %116, %117 : vector<16x1xf32>
    %119 = vector.broadcast %111 : vector<16x1xf32> to vector<16x32xf32>
    %120 = arith.subf %107, %119 : vector<16x32xf32>
    %cst_42 = arith.constant 9.99999974E-6 : f32
    %121 = vector.broadcast %cst_42 : f32 to vector<16x1xf32>
    %122 = arith.addf %118, %121 : vector<16x1xf32>
    %123 = math.rsqrt %122 : vector<16x1xf32>
    %124 = vector.broadcast %123 : vector<16x1xf32> to vector<16x32xf32>
    %125 = arith.mulf %120, %124 : vector<16x32xf32>
    %126 = vector.broadcast %11 : vector<1x32xf32> to vector<16x32xf32>
    %127 = arith.mulf %125, %126 : vector<16x32xf32>
    %128 = vector.broadcast %12 : vector<1x32xf32> to vector<16x32xf32>
    %129 = arith.addf %127, %128 : vector<16x32xf32>
    %c0_43 = arith.constant 0 : index
    %c0_44 = arith.constant 0 : index
    %130 = vector.load %arg5[%c0_43, %c0_44] : memref<16x32xf32, #tpu.memory_space<vmem>>, vector<16x32xf32>
    tpu.vector_store %arg5[%c0_43, %c0_44], %129 {strides = array<i32>} : memref<16x32xf32, #tpu.memory_space<vmem>>, vector<16x32xf32>,
    return
  }
  func.func @transform_0(%arg0: i32) -> (i32, i32) {
    %c0_i32 = arith.constant 0 : i32
    %c0_i32_0 = arith.constant 0 : i32
    %c0_i32_1 = arith.constant 0 : i32
    return %c0_i32, %c0_i32_0 : i32, i32
  }
  func.func @transform_1(%arg0: i32) -> (i32, i32) {
    %c0_i32 = arith.constant 0 : i32
    %c0_i32_0 = arith.constant 0 : i32
    %c0_i32_1 = arith.constant 0 : i32
    return %c0_i32, %c0_i32_0 : i32, i32
  }
  func.func @transform_2(%arg0: i32) -> (i32, i32) {
    %c0_i32 = arith.constant 0 : i32
    %c0_i32_0 = arith.constant 0 : i32
    %c0_i32_1 = arith.constant 0 : i32
    return %c0_i32, %c0_i32_0 : i32, i32
  }
  func.func @transform_3(%arg0: i32) -> (i32, i32) {
    %c0_i32 = arith.constant 0 : i32
    %c0_i32_0 = arith.constant 0 : i32
    %c0_i32_1 = arith.constant 0 : i32
    return %c0_i32, %c0_i32_0 : i32, i32
  }
  func.func @transform_4(%arg0: i32) -> (i32, i32) {
    %c0_i32 = arith.constant 0 : i32
    %c0_i32_0 = arith.constant 0 : i32
    %c0_i32_1 = arith.constant 0 : i32
    return %c0_i32, %c0_i32_0 : i32, i32
  }
  func.func @transform_5(%arg0: i32) -> (i32, i32, i32, i32) {
    %c0_i32 = arith.constant 0 : i32
    %c0_i32_0 = arith.constant 0 : i32
    %c0_i32_1 = arith.constant 0 : i32
    %c0_i32_2 = arith.constant 0 : i32
    %c0_i32_3 = arith.constant 0 : i32
    return %c0_i32, %c0_i32_0, %c0_i32_1, %c0_i32_2 : i32, i32, i32, i32
  }
}

</mosaic_0001>

<llo_original>
// kernel: transformer_encoder_layer.1
$region0: #{transformer_encoder_layer.1}
  #allocation0 [shape = 'u32[]', space=smem, size = 0x4, offset = 0x4, fixed_abs, tag = 'smem constant byte address 0x4 - core index']
  #allocation1 [shape = 'u32[144,128]{1,0:T(1,128)}', space=vmem, size = 0x12000, scoped, tag = 'internal scratch']
  %s0 = inlined_call_operand.vmem [shape: f32[16,32], index: 0, kind: input, shape index: {}]
  %s1 = inlined_call_operand.vmem [shape: f32[32,384], index: 1, kind: input, shape index: {}]
  %s2 = inlined_call_operand.vmem [shape: f32[64,32], index: 2, kind: input, shape index: {}]
  %s3 = inlined_call_operand.vmem [shape: f32[16,128], index: 3, kind: input, shape index: {}]
  %s4 = inlined_call_operand.vmem [shape: f32[16,32], index: 4, kind: output, shape index: {0}]
  %s5 = inlined_call_operand.vmem [shape: f32[4,2,8,8], index: 5, kind: output, shape index: {1}]
  %6 = xla_tuple %s4, %s5
  %s7 = sld [smem:[#allocation0]]
  $region34: #{transformer_encoder_layer.1} parent=0
    _
  %s9 = ssub.s32 1, %s7
  %s10 = scalar_select 0, %s9, %s7
  // Predicated region
  $region2: #{transformer_encoder_layer.1} parent=0 // pred_check
    _
  $region3: #{transformer_encoder_layer.1} parent=0 // pred_check_branch
    %12 = sbr.rel (0) target = $region5
  $region4: #{transformer_encoder_layer.1} parent=0 // pred_region
    _
  $region5: #{transformer_encoder_layer.1} parent=0 // pred_fallthru
    _
  // Predicated region
  $region6: #{transformer_encoder_layer.1} parent=0 // pred_check
    _
  $region7: #{transformer_encoder_layer.1} parent=0 // pred_check_branch
    %14 = sbr.rel (0) target = $region9
  $region8: #{transformer_encoder_layer.1} parent=0 // pred_region
    _
  $region9: #{transformer_encoder_layer.1} parent=0 // pred_fallthru
    _
  // Predicated region
  $region10: #{transformer_encoder_layer.1} parent=0 // pred_check
    _
  $region11: #{transformer_encoder_layer.1} parent=0 // pred_check_branch
    %16 = sbr.rel (0) target = $region13
  $region12: #{transformer_encoder_layer.1} parent=0 // pred_region
    _
  $region13: #{transformer_encoder_layer.1} parent=0 // pred_fallthru
    _
  // Predicated region
  $region14: #{transformer_encoder_layer.1} parent=0 // pred_check
    _
  $region15: #{transformer_encoder_layer.1} parent=0 // pred_check_branch
    %18 = sbr.rel (0) target = $region17
  $region16: #{transformer_encoder_layer.1} parent=0 // pred_region
    _
  $region17: #{transformer_encoder_layer.1} parent=0 // pred_fallthru
    _
  %v19 = vld [vmem:[%s0] sm:$0xff]
  %v20 = vld [vmem:[%s0 + $0x8] sm:$0xff]
  %v21 = vld [vmem:[%s1] sm:$0xff]
  %v22 = vld [vmem:[%s1 + $0x18] sm:$0xff]
  %v23 = vld [vmem:[%s1 + $0x30] sm:$0xff]
  %v24 = vld [vmem:[%s1 + $0x48] sm:$0xff]
  %v25 = vld [vmem:[%s1 + $0x8] sm:$0xff]
  %v26 = vld [vmem:[%s1 + $0x20] sm:$0xff]
  %v27 = vld [vmem:[%s1 + $0x38] sm:$0xff]
  %v28 = vld [vmem:[%s1 + $0x50] sm:$0xff]
  %v29 = vld [vmem:[%s1 + $0x10] sm:$0xff]
  %v30 = vld [vmem:[%s1 + $0x28] sm:$0xff]
  %v31 = vld [vmem:[%s1 + $0x40] sm:$0xff]
  %v32 = vld [vmem:[%s1 + $0x58] sm:$0xff]
  %v33 = vld [vmem:[%s2] sm:$0xff]
  %v34 = vld [vmem:[%s2 + $0x8] sm:$0xff]
  %v35 = vld [vmem:[%s2 + $0x10] sm:$0xff]
  %v36 = vld [vmem:[%s2 + $0x18] sm:$0xff]
  %v37 = vld [vmem:[%s2 + $0x20] sm:$0xff]
  %v38 = vld [vmem:[%s2 + $0x28] sm:$0xff]
  %v39 = vld [vmem:[%s2 + $0x30] sm:$0xff]
  %v40 = vld [vmem:[%s2 + $0x38] sm:$0xff]
  %v41 = vld [vmem:[%s3] sm:$0x1]
  %v42 = vld [vmem:[%s3 + $0x1] sm:$0x1]
  %v43 = vld [vmem:[%s3 + $0x2] sm:$0x1]
  %v44 = vld [vmem:[%s3 + $0x3] sm:$0x1]
  %v45 = vld [vmem:[%s3 + $0x4] sm:$0x1]
  %v46 = vld [vmem:[%s3 + $0x5] sm:$0x1]
  %v47 = vld [vmem:[%s3 + $0x6] sm:$0x1]
  %v48 = vld [vmem:[%s3 + $0x7] sm:$0x1]
  %v49 = vlaneseq
  %v50 = vshrl.u32 %v49, 7
  %v51 = vsub.s32 0, %v50
  %v52 = vrot.slane %v41, %v51
  %vm53 = vcmask 261120
  %v55 = vsel %vm53, %v19, 0
  %v58 = vsel %vm53, %v20, 0
  %60 = vmatprep.subr.mxu0 0.0
  %61 = vmatpush1.msra.mxu0 %v21
  %62 = vmatprep.subr.mxu0 0.0
  %63 = vmatpush1.msra.mxu0 %v22
  %64 = vmatprep.subr.mxu0 0.0
  %65 = vmatpush1.msra.mxu0 %v23
  %66 = vmatprep.subr.mxu0 0.0
  %67 = vmatpush1.msra.mxu0 %v24
  %68 = vmatprep.subr.mxu0 0.0
  %69 = vmatpush1.msra.mxu0 0.0
  %70 = vmatprep.subr.mxu0 0.0
  %71 = vmatpush1.msra.mxu0 0.0
  %72 = vmatprep.subr.mxu0 0.0
  %73 = vmatpush1.msra.mxu0 0.0
  %74 = vmatprep.subr.mxu0 0.0
  %75 = vmatpush1.msra.mxu0 0.0
  %76 = vmatprep.subr.mxu0 0.0
  %77 = vmatpush1.msra.mxu0 0.0
  %78 = vmatprep.subr.mxu0 0.0
  %79 = vmatpush1.msra.mxu0 0.0
  %80 = vmatprep.subr.mxu0 0.0
  %81 = vmatpush1.msra.mxu0 0.0
  %82 = vmatprep.subr.mxu0 0.0
  %83 = vmatpush1.msra.mxu0 0.0
  %84 = vmatprep.subr.mxu0 0.0
  %85 = vmatpush1.msra.mxu0 0.0
  %86 = vmatprep.subr.mxu0 0.0
  %87 = vmatpush1.msra.mxu0 0.0
  %88 = vmatprep.subr.mxu0 0.0
  %89 = vmatpush1.msra.mxu0 0.0
  %90 = vmatprep.subr.mxu0 0.0
  %91 = vmatpush1.msra.mxu0 0.0
  %92 = vmatprep.subr.mxu0 0.0
  %93 = vmatpush1.msra.mxu0 0.0
  %94 = vmatprep.subr.mxu0 0.0
  %95 = vmatpush1.msra.mxu0 0.0
  %96 = vmatprep.subr.mxu0 0.0
  %97 = vmatpush1.msra.mxu0 0.0
  %98 = vmatprep.subr.mxu0 0.0
  %99 = vmatpush1.msra.mxu0 0.0
  %100 = vmatprep.subr.mxu0 0.0
  %101 = vmatpush1.msra.mxu0 0.0
  %102 = vmatprep.subr.mxu0 0.0
  %103 = vmatpush1.msra.mxu0 0.0
  %104 = vmatprep.subr.mxu0 0.0
  %105 = vmatpush1.msra.mxu0 0.0
  %106 = vmatprep.subr.mxu0 0.0
  %107 = vmatpush1.msra.mxu0 0.0
  %108 = vmatprep.subr.mxu0 0.0
  %109 = vmatpush1.msra.mxu0 0.0
  %110 = vmatprep.subr.mxu0 0.0
  %111 = vmatpush1.msra.mxu0 0.0
  %112 = vmatprep.subr.mxu0 0.0
  %113 = vmatpush1.msra.mxu0 0.0
  %114 = vmatprep.subr.mxu0 0.0
  %115 = vmatpush1.msra.mxu0 0.0
  %116 = vmatprep.subr.mxu0 0.0
  %117 = vmatpush1.msra.mxu0 0.0
  %118 = vmatprep.subr.mxu0 0.0
  %119 = vmatpush1.msra.mxu0 0.0
  %120 = vmatprep.subr.mxu0 0.0
  %121 = vmatpush1.msra.mxu0 0.0
  %122 = vmatprep.subr.mxu0 0.0
  %123 = vmatpush1.msra.mxu0 0.0
  %124 = vmatprep.mubr.f32.mxu0 0.0
  %125 = vmatmul.mubr.f32.gmra.mrb[0].mxu0 %v55
  %v126 = vpop.f32.mrb[0].mxu0
  %v127 = vadd.f32 %v52, %v126
  %v128 = vpop.f32.mrb[0].mxu0
  %129 = vmatprep.mubr.f32.mxu0 0.0
  %130 = vmatmul.mubr.f32.gmra.mrb[0].mxu0 %v58
  %v131 = vpop.f32.mrb[0].mxu0
  %v132 = vadd.f32 %v52, %v131
  %v133 = vpop.f32.mrb[0].mxu0
  %134 = vdwg.mxu0
  %137 = vrot.lane.b32.xlu0 %v127, 120
  %v138 = vpop.permute.xlu0 %137
  %139 = vrot.lane.b32.xlu0 %v132, 120
  %v140 = vpop.permute.xlu0 %139
  %141 = vrot.lane.b32.xlu0 %v127, 112
  %v142 = vpop.permute.xlu0 %141
  %143 = vrot.lane.b32.xlu0 %v132, 112
  %v144 = vpop.permute.xlu0 %143
  %145 = vrot.lane.b32.xlu0 %v127, 104
  %v146 = vpop.permute.xlu0 %145
  %147 = vrot.lane.b32.xlu0 %v132, 104
  %v148 = vpop.permute.xlu0 %147
  %149 = vrot.lane.b32.xlu0 %v127, 88
  %v150 = vpop.permute.xlu0 %149
  %vm151 = vcmask 64512
  %v152 = vsel %vm151, %v138, 0
  %v154 = vsel %vm151, %v150, 0
  %156 = vmatprep.subr.mxu0 0.0
  %157 = vmatpush1.xpose.msra.mxu0 %v154
  %158 = vmatprep.subr.mxu0 0.0
  %159 = vmatpush1.xpose.msra.mxu0 0.0
  %160 = vmatprep.subr.mxu0 0.0
  %161 = vmatpush1.xpose.msra.mxu0 0.0
  %162 = vmatprep.subr.mxu0 0.0
  %163 = vmatpush1.xpose.msra.mxu0 0.0
  %164 = vmatprep.subr.mxu0 0.0
  %165 = vmatpush1.xpose.msra.mxu0 0.0
  %166 = vmatprep.subr.mxu0 0.0
  %167 = vmatpush1.xpose.msra.mxu0 0.0
  %168 = vmatprep.subr.mxu0 0.0
  %169 = vmatpush1.xpose.msra.mxu0 0.0
  %170 = vmatprep.subr.mxu0 0.0
  %171 = vmatpush1.xpose.msra.mxu0 0.0
  %172 = vmatprep.subr.mxu0 0.0
  %173 = vmatpush1.xpose.msra.mxu0 0.0
  %174 = vmatprep.subr.mxu0 0.0
  %175 = vmatpush1.xpose.msra.mxu0 0.0
  %176 = vmatprep.subr.mxu0 0.0
  %177 = vmatpush1.xpose.msra.mxu0 0.0
  %178 = vmatprep.subr.mxu0 0.0
  %179 = vmatpush1.xpose.msra.mxu0 0.0
  %180 = vmatprep.subr.mxu0 0.0
  %181 = vmatpush1.xpose.msra.mxu0 0.0
  %182 = vmatprep.subr.mxu0 0.0
  %183 = vmatpush1.xpose.msra.mxu0 0.0
  %184 = vmatprep.subr.mxu0 0.0
  %185 = vmatpush1.xpose.msra.mxu0 0.0
  %186 = vmatprep.subr.mxu0 0.0
  %187 = vmatpush1.xpose.msra.mxu0 0.0
  %188 = vmatprep.subr.mxu0 0.0
  %189 = vmatpush1.xpose.msra.mxu0 0.0
  %190 = vmatprep.subr.mxu0 0.0
  %191 = vmatpush1.xpose.msra.mxu0 0.0
  %192 = vmatprep.subr.mxu0 0.0
  %193 = vmatpush1.xpose.msra.mxu0 0.0
  %194 = vmatprep.subr.mxu0 0.0
  %195 = vmatpush1.xpose.msra.mxu0 0.0
  %196 = vmatprep.subr.mxu0 0.0
  %197 = vmatpush1.xpose.msra.mxu0 0.0
  %198 = vmatprep.subr.mxu0 0.0
  %199 = vmatpush1.xpose.msra.mxu0 0.0
  %200 = vmatprep.subr.mxu0 0.0
  %201 = vmatpush1.xpose.msra.mxu0 0.0
  %202 = vmatprep.subr.mxu0 0.0
  %203 = vmatpush1.xpose.msra.mxu0 0.0
  %204 = vmatprep.subr.mxu0 0.0
  %205 = vmatpush1.xpose.msra.mxu0 0.0
  %206 = vmatprep.subr.mxu0 0.0
  %207 = vmatpush1.xpose.msra.mxu0 0.0
  %208 = vmatprep.subr.mxu0 0.0
  %209 = vmatpush1.xpose.msra.mxu0 0.0
  %210 = vmatprep.subr.mxu0 0.0
  %211 = vmatpush1.xpose.msra.mxu0 0.0
  %212 = vmatprep.subr.mxu0 0.0
  %213 = vmatpush1.xpose.msra.mxu0 0.0
  %214 = vmatprep.subr.mxu0 0.0
  %215 = vmatpush1.xpose.msra.mxu0 0.0
  %216 = vmatprep.subr.mxu0 0.0
  %217 = vmatpush1.xpose.msra.mxu0 0.0
  %218 = vmatprep.subr.mxu0 0.0
  %219 = vmatpush1.xpose.msra.mxu0 0.0
  %220 = vmatprep.mubr.f32.mxu0 0.0
  %221 = vmatmul.mubr.f32.gmra.mrb[0].mxu0 %v152
  %v222 = vpop.f32.mrb[0].mxu0
  %v223 = vadd.f32 0.0, %v222
  %v224 = vpop.f32.mrb[0].mxu0
  %225 = vdwg.mxu0
  %226 = vrot.lane.b32.xlu0 %v132, 88
  %v227 = vpop.permute.xlu0 %226
  %v228 = vsel %vm151, %v140, 0
  %v230 = vsel %vm151, %v227, 0
  %232 = vmatprep.subr.mxu0 0.0
  %233 = vmatpush1.xpose.msra.mxu0 %v230
  %234 = vmatprep.subr.mxu0 0.0
  %235 = vmatpush1.xpose.msra.mxu0 0.0
  %236 = vmatprep.subr.mxu0 0.0
  %237 = vmatpush1.xpose.msra.mxu0 0.0
  %238 = vmatprep.subr.mxu0 0.0
  %239 = vmatpush1.xpose.msra.mxu0 0.0
  %240 = vmatprep.subr.mxu0 0.0
  %241 = vmatpush1.xpose.msra.mxu0 0.0
  %242 = vmatprep.subr.mxu0 0.0
  %243 = vmatpush1.xpose.msra.mxu0 0.0
  %244 = vmatprep.subr.mxu0 0.0
  %245 = vmatpush1.xpose.msra.mxu0 0.0
  %246 = vmatprep.subr.mxu0 0.0
  %247 = vmatpush1.xpose.msra.mxu0 0.0
  %248 = vmatprep.subr.mxu0 0.0
  %249 = vmatpush1.xpose.msra.mxu0 0.0
  %250 = vmatprep.subr.mxu0 0.0
  %251 = vmatpush1.xpose.msra.mxu0 0.0
  %252 = vmatprep.subr.mxu0 0.0
  %253 = vmatpush1.xpose.msra.mxu0 0.0
  %254 = vmatprep.subr.mxu0 0.0
  %255 = vmatpush1.xpose.msra.mxu0 0.0
  %256 = vmatprep.subr.mxu0 0.0
  %257 = vmatpush1.xpose.msra.mxu0 0.0
  %258 = vmatprep.subr.mxu0 0.0
  %259 = vmatpush1.xpose.msra.mxu0 0.0
  %260 = vmatprep.subr.mxu0 0.0
  %261 = vmatpush1.xpose.msra.mxu0 0.0
  %262 = vmatprep.subr.mxu0 0.0
  %263 = vmatpush1.xpose.msra.mxu0 0.0
  %264 = vmatprep.subr.mxu0 0.0
  %265 = vmatpush1.xpose.msra.mxu0 0.0
  %266 = vmatprep.subr.mxu0 0.0
  %267 = vmatpush1.xpose.msra.mxu0 0.0
  %268 = vmatprep.subr.mxu0 0.0
  %269 = vmatpush1.xpose.msra.mxu0 0.0
  %270 = vmatprep.subr.mxu0 0.0
  %271 = vmatpush1.xpose.msra.mxu0 0.0
  %272 = vmatprep.subr.mxu0 0.0
  %273 = vmatpush1.xpose.msra.mxu0 0.0
  %274 = vmatprep.subr.mxu0 0.0
  %275 = vmatpush1.xpose.msra.mxu0 0.0
  %276 = vmatprep.subr.mxu0 0.0
  %277 = vmatpush1.xpose.msra.mxu0 0.0
  %278 = vmatprep.subr.mxu0 0.0
  %279 = vmatpush1.xpose.msra.mxu0 0.0
  %280 = vmatprep.subr.mxu0 0.0
  %281 = vmatpush1.xpose.msra.mxu0 0.0
  %282 = vmatprep.subr.mxu0 0.0
  %283 = vmatpush1.xpose.msra.mxu0 0.0
  %284 = vmatprep.subr.mxu0 0.0
  %285 = vmatpush1.xpose.msra.mxu0 0.0
  %286 = vmatprep.subr.mxu0 0.0
  %287 = vmatpush1.xpose.msra.mxu0 0.0
  %288 = vmatprep.subr.mxu0 0.0
  %289 = vmatpush1.xpose.msra.mxu0 0.0
  %290 = vmatprep.subr.mxu0 0.0
  %291 = vmatpush1.xpose.msra.mxu0 0.0
  %292 = vmatprep.subr.mxu0 0.0
  %293 = vmatpush1.xpose.msra.mxu0 0.0
  %294 = vmatprep.subr.mxu0 0.0
  %295 = vmatpush1.xpose.msra.mxu0 0.0
  %296 = vmatprep.mubr.f32.mxu0 0.0
  %297 = vmatmul.mubr.f32.gmra.mrb[0].mxu0 %v228
  %v298 = vpop.f32.mrb[0].mxu0
  %v299 = vadd.f32 0.0, %v298
  %v300 = vpop.f32.mrb[0].mxu0
  %301 = vdwg.mxu0
  %302 = vrot.lane.b32.xlu0 %v138, 120
  %v303 = vpop.permute.xlu0 %302
  %304 = vrot.lane.b32.xlu0 %v138, 88
  %v305 = vpop.permute.xlu0 %304
  %v306 = vsel %vm151, %v303, 0
  %v308 = vsel %vm151, %v305, 0
  %310 = vmatprep.subr.mxu0 0.0
  %311 = vmatpush1.xpose.msra.mxu0 %v308
  %312 = vmatprep.subr.mxu0 0.0
  %313 = vmatpush1.xpose.msra.mxu0 0.0
  %314 = vmatprep.subr.mxu0 0.0
  %315 = vmatpush1.xpose.msra.mxu0 0.0
  %316 = vmatprep.subr.mxu0 0.0
  %317 = vmatpush1.xpose.msra.mxu0 0.0
  %318 = vmatprep.subr.mxu0 0.0
  %319 = vmatpush1.xpose.msra.mxu0 0.0
  %320 = vmatprep.subr.mxu0 0.0
  %321 = vmatpush1.xpose.msra.mxu0 0.0
  %322 = vmatprep.subr.mxu0 0.0
  %323 = vmatpush1.xpose.msra.mxu0 0.0
  %324 = vmatprep.subr.mxu0 0.0
  %325 = vmatpush1.xpose.msra.mxu0 0.0
  %326 = vmatprep.subr.mxu0 0.0
  %327 = vmatpush1.xpose.msra.mxu0 0.0
  %328 = vmatprep.subr.mxu0 0.0
  %329 = vmatpush1.xpose.msra.mxu0 0.0
  %330 = vmatprep.subr.mxu0 0.0
  %331 = vmatpush1.xpose.msra.mxu0 0.0
  %332 = vmatprep.subr.mxu0 0.0
  %333 = vmatpush1.xpose.msra.mxu0 0.0
  %334 = vmatprep.subr.mxu0 0.0
  %335 = vmatpush1.xpose.msra.mxu0 0.0
  %336 = vmatprep.subr.mxu0 0.0
  %337 = vmatpush1.xpose.msra.mxu0 0.0
  %338 = vmatprep.subr.mxu0 0.0
  %339 = vmatpush1.xpose.msra.mxu0 0.0
  %340 = vmatprep.subr.mxu0 0.0
  %341 = vmatpush1.xpose.msra.mxu0 0.0
  %342 = vmatprep.subr.mxu0 0.0
  %343 = vmatpush1.xpose.msra.mxu0 0.0
  %344 = vmatprep.subr.mxu0 0.0
  %345 = vmatpush1.xpose.msra.mxu0 0.0
  %346 = vmatprep.subr.mxu0 0.0
  %347 = vmatpush1.xpose.msra.mxu0 0.0
  %348 = vmatprep.subr.mxu0 0.0
  %349 = vmatpush1.xpose.msra.mxu0 0.0
  %350 = vmatprep.subr.mxu0 0.0
  %351 = vmatpush1.xpose.msra.mxu0 0.0
  %352 = vmatprep.subr.mxu0 0.0
  %353 = vmatpush1.xpose.msra.mxu0 0.0
  %354 = vmatprep.subr.mxu0 0.0
  %355 = vmatpush1.xpose.msra.mxu0 0.0
  %356 = vmatprep.subr.mxu0 0.0
  %357 = vmatpush1.xpose.msra.mxu0 0.0
  %358 = vmatprep.subr.mxu0 0.0
  %359 = vmatpush1.xpose.msra.mxu0 0.0
  %360 = vmatprep.subr.mxu0 0.0
  %361 = vmatpush1.xpose.msra.mxu0 0.0
  %362 = vmatprep.subr.mxu0 0.0
  %363 = vmatpush1.xpose.msra.mxu0 0.0
  %364 = vmatprep.subr.mxu0 0.0
  %365 = vmatpush1.xpose.msra.mxu0 0.0
  %366 = vmatprep.subr.mxu0 0.0
  %367 = vmatpush1.xpose.msra.mxu0 0.0
  %368 = vmatprep.subr.mxu0 0.0
  %369 = vmatpush1.xpose.msra.mxu0 0.0
  %370 = vmatprep.subr.mxu0 0.0
  %371 = vmatpush1.xpose.msra.mxu0 0.0
  %372 = vmatprep.subr.mxu0 0.0
  %373 = vmatpush1.xpose.msra.mxu0 0.0
  %374 = vmatprep.mubr.f32.mxu0 0.0
  %375 = vmatmul.mubr.f32.gmra.mrb[0].mxu0 %v306
  %v376 = vpop.f32.mrb[0].mxu0
  %v377 = vadd.f32 0.0, %v376
  %v378 = vpop.f32.mrb[0].mxu0
  %379 = vdwg.mxu0
  %380 = vrot.lane.b32.xlu0 %v140, 120
  %v381 = vpop.permute.xlu0 %380
  %382 = vrot.lane.b32.xlu0 %v140, 88
  %v383 = vpop.permute.xlu0 %382
  %v384 = vsel %vm151, %v381, 0
  %v386 = vsel %vm151, %v383, 0
  %388 = vmatprep.subr.mxu0 0.0
  %389 = vmatpush1.xpose.msra.mxu0 %v386
  %390 = vmatprep.subr.mxu0 0.0
  %391 = vmatpush1.xpose.msra.mxu0 0.0
  %392 = vmatprep.subr.mxu0 0.0
  %393 = vmatpush1.xpose.msra.mxu0 0.0
  %394 = vmatprep.subr.mxu0 0.0
  %395 = vmatpush1.xpose.msra.mxu0 0.0
  %396 = vmatprep.subr.mxu0 0.0
  %397 = vmatpush1.xpose.msra.mxu0 0.0
  %398 = vmatprep.subr.mxu0 0.0
  %399 = vmatpush1.xpose.msra.mxu0 0.0
  %400 = vmatprep.subr.mxu0 0.0
  %401 = vmatpush1.xpose.msra.mxu0 0.0
  %402 = vmatprep.subr.mxu0 0.0
  %403 = vmatpush1.xpose.msra.mxu0 0.0
  %404 = vmatprep.subr.mxu0 0.0
  %405 = vmatpush1.xpose.msra.mxu0 0.0
  %406 = vmatprep.subr.mxu0 0.0
  %407 = vmatpush1.xpose.msra.mxu0 0.0
  %408 = vmatprep.subr.mxu0 0.0
  %409 = vmatpush1.xpose.msra.mxu0 0.0
  %410 = vmatprep.subr.mxu0 0.0
  %411 = vmatpush1.xpose.msra.mxu0 0.0
  %412 = vmatprep.subr.mxu0 0.0
  %413 = vmatpush1.xpose.msra.mxu0 0.0
  %414 = vmatprep.subr.mxu0 0.0
  %415 = vmatpush1.xpose.msra.mxu0 0.0
  %416 = vmatprep.subr.mxu0 0.0
  %417 = vmatpush1.xpose.msra.mxu0 0.0
  %418 = vmatprep.subr.mxu0 0.0
  %419 = vmatpush1.xpose.msra.mxu0 0.0
  %420 = vmatprep.subr.mxu0 0.0
  %421 = vmatpush1.xpose.msra.mxu0 0.0
  %422 = vmatprep.subr.mxu0 0.0
  %423 = vmatpush1.xpose.msra.mxu0 0.0
  %424 = vmatprep.subr.mxu0 0.0
  %425 = vmatpush1.xpose.msra.mxu0 0.0
  %426 = vmatprep.subr.mxu0 0.0
  %427 = vmatpush1.xpose.msra.mxu0 0.0
  %428 = vmatprep.subr.mxu0 0.0
  %429 = vmatpush1.xpose.msra.mxu0 0.0
  %430 = vmatprep.subr.mxu0 0.0
  %431 = vmatpush1.xpose.msra.mxu0 0.0
  %432 = vmatprep.subr.mxu0 0.0
  %433 = vmatpush1.xpose.msra.mxu0 0.0
  %434 = vmatprep.subr.mxu0 0.0
  %435 = vmatpush1.xpose.msra.mxu0 0.0
  %436 = vmatprep.subr.mxu0 0.0
  %437 = vmatpush1.xpose.msra.mxu0 0.0
  %438 = vmatprep.subr.mxu0 0.0
  %439 = vmatpush1.xpose.msra.mxu0 0.0
  %440 = vmatprep.subr.mxu0 0.0
  %441 = vmatpush1.xpose.msra.mxu0 0.0
  %442 = vmatprep.subr.mxu0 0.0
  %443 = vmatpush1.xpose.msra.mxu0 0.0
  %444 = vmatprep.subr.mxu0 0.0
  %445 = vmatpush1.xpose.msra.mxu0 0.0
  %446 = vmatprep.subr.mxu0 0.0
  %447 = vmatpush1.xpose.msra.mxu0 0.0
  %448 = vmatprep.subr.mxu0 0.0
  %449 = vmatpush1.xpose.msra.mxu0 0.0
  %450 = vmatprep.subr.mxu0 0.0
  %451 = vmatpush1.xpose.msra.mxu0 0.0
  %452 = vmatprep.mubr.f32.mxu0 0.0
  %453 = vmatmul.mubr.f32.gmra.mrb[0].mxu0 %v384
  %v454 = vpop.f32.mrb[0].mxu0
  %v455 = vadd.f32 0.0, %v454
  %v456 = vpop.f32.mrb[0].mxu0
  %457 = vdwg.mxu0
  %458 = vrot.lane.b32.xlu0 %v142, 120
  %v459 = vpop.permute.xlu0 %458
  %460 = vrot.lane.b32.xlu0 %v142, 88
  %v461 = vpop.permute.xlu0 %460
  %v462 = vsel %vm151, %v459, 0
  %v464 = vsel %vm151, %v461, 0
  %466 = vmatprep.subr.mxu0 0.0
  %467 = vmatpush1.xpose.msra.mxu0 %v464
  %468 = vmatprep.subr.mxu0 0.0
  %469 = vmatpush1.xpose.msra.mxu0 0.0
  %470 = vmatprep.subr.mxu0 0.0
  %471 = vmatpush1.xpose.msra.mxu0 0.0
  %472 = vmatprep.subr.mxu0 0.0
  %473 = vmatpush1.xpose.msra.mxu0 0.0
  %474 = vmatprep.subr.mxu0 0.0
  %475 = vmatpush1.xpose.msra.mxu0 0.0
  %476 = vmatprep.subr.mxu0 0.0
  %477 = vmatpush1.xpose.msra.mxu0 0.0
  %478 = vmatprep.subr.mxu0 0.0
  %479 = vmatpush1.xpose.msra.mxu0 0.0
  %480 = vmatprep.subr.mxu0 0.0
  %481 = vmatpush1.xpose.msra.mxu0 0.0
  %482 = vmatprep.subr.mxu0 0.0
  %483 = vmatpush1.xpose.msra.mxu0 0.0
  %484 = vmatprep.subr.mxu0 0.0
  %485 = vmatpush1.xpose.msra.mxu0 0.0
  %486 = vmatprep.subr.mxu0 0.0
  %487 = vmatpush1.xpose.msra.mxu0 0.0
  %488 = vmatprep.subr.mxu0 0.0
  %489 = vmatpush1.xpose.msra.mxu0 0.0
  %490 = vmatprep.subr.mxu0 0.0
  %491 = vmatpush1.xpose.msra.mxu0 0.0
  %492 = vmatprep.subr.mxu0 0.0
  %493 = vmatpush1.xpose.msra.mxu0 0.0
  %494 = vmatprep.subr.mxu0 0.0
  %495 = vmatpush1.xpose.msra.mxu0 0.0
  %496 = vmatprep.subr.mxu0 0.0
  %497 = vmatpush1.xpose.msra.mxu0 0.0
  %498 = vmatprep.subr.mxu0 0.0
  %499 = vmatpush1.xpose.msra.mxu0 0.0
  %500 = vmatprep.subr.mxu0 0.0
  %501 = vmatpush1.xpose.msra.mxu0 0.0
  %502 = vmatprep.subr.mxu0 0.0
  %503 = vmatpush1.xpose.msra.mxu0 0.0
  %504 = vmatprep.subr.mxu0 0.0
  %505 = vmatpush1.xpose.msra.mxu0 0.0
  %506 = vmatprep.subr.mxu0 0.0
  %507 = vmatpush1.xpose.msra.mxu0 0.0
  %508 = vmatprep.subr.mxu0 0.0
  %509 = vmatpush1.xpose.msra.mxu0 0.0
  %510 = vmatprep.subr.mxu0 0.0
  %511 = vmatpush1.xpose.msra.mxu0 0.0
  %512 = vmatprep.subr.mxu0 0.0
  %513 = vmatpush1.xpose.msra.mxu0 0.0
  %514 = vmatprep.subr.mxu0 0.0
  %515 = vmatpush1.xpose.msra.mxu0 0.0
  %516 = vmatprep.subr.mxu0 0.0
  %517 = vmatpush1.xpose.msra.mxu0 0.0
  %518 = vmatprep.subr.mxu0 0.0
  %519 = vmatpush1.xpose.msra.mxu0 0.0
  %520 = vmatprep.subr.mxu0 0.0
  %521 = vmatpush1.xpose.msra.mxu0 0.0
  %522 = vmatprep.subr.mxu0 0.0
  %523 = vmatpush1.xpose.msra.mxu0 0.0
  %524 = vmatprep.subr.mxu0 0.0
  %525 = vmatpush1.xpose.msra.mxu0 0.0
  %526 = vmatprep.subr.mxu0 0.0
  %527 = vmatpush1.xpose.msra.mxu0 0.0
  %528 = vmatprep.subr.mxu0 0.0
  %529 = vmatpush1.xpose.msra.mxu0 0.0
  %530 = vmatprep.mubr.f32.mxu0 0.0
  %531 = vmatmul.mubr.f32.gmra.mrb[0].mxu0 %v462
  %v532 = vpop.f32.mrb[0].mxu0
  %v533 = vadd.f32 0.0, %v532
  %v534 = vpop.f32.mrb[0].mxu0
  %535 = vdwg.mxu0
  %536 = vrot.lane.b32.xlu0 %v144, 120
  %v537 = vpop.permute.xlu0 %536
  %538 = vrot.lane.b32.xlu0 %v144, 88
  %v539 = vpop.permute.xlu0 %538
  %v540 = vsel %vm151, %v537, 0
  %v542 = vsel %vm151, %v539, 0
  %544 = vmatprep.subr.mxu0 0.0
  %545 = vmatpush1.xpose.msra.mxu0 %v542
  %546 = vmatprep.subr.mxu0 0.0
  %547 = vmatpush1.xpose.msra.mxu0 0.0
  %548 = vmatprep.subr.mxu0 0.0
  %549 = vmatpush1.xpose.msra.mxu0 0.0
  %550 = vmatprep.subr.mxu0 0.0
  %551 = vmatpush1.xpose.msra.mxu0 0.0
  %552 = vmatprep.subr.mxu0 0.0
  %553 = vmatpush1.xpose.msra.mxu0 0.0
  %554 = vmatprep.subr.mxu0 0.0
  %555 = vmatpush1.xpose.msra.mxu0 0.0
  %556 = vmatprep.subr.mxu0 0.0
  %557 = vmatpush1.xpose.msra.mxu0 0.0
  %558 = vmatprep.subr.mxu0 0.0
  %559 = vmatpush1.xpose.msra.mxu0 0.0
  %560 = vmatprep.subr.mxu0 0.0
  %561 = vmatpush1.xpose.msra.mxu0 0.0
  %562 = vmatprep.subr.mxu0 0.0
  %563 = vmatpush1.xpose.msra.mxu0 0.0
  %564 = vmatprep.subr.mxu0 0.0
  %565 = vmatpush1.xpose.msra.mxu0 0.0
  %566 = vmatprep.subr.mxu0 0.0
  %567 = vmatpush1.xpose.msra.mxu0 0.0
  %568 = vmatprep.subr.mxu0 0.0
  %569 = vmatpush1.xpose.msra.mxu0 0.0
  %570 = vmatprep.subr.mxu0 0.0
  %571 = vmatpush1.xpose.msra.mxu0 0.0
  %572 = vmatprep.subr.mxu0 0.0
  %573 = vmatpush1.xpose.msra.mxu0 0.0
  %574 = vmatprep.subr.mxu0 0.0
  %575 = vmatpush1.xpose.msra.mxu0 0.0
  %576 = vmatprep.subr.mxu0 0.0
  %577 = vmatpush1.xpose.msra.mxu0 0.0
  %578 = vmatprep.subr.mxu0 0.0
  %579 = vmatpush1.xpose.msra.mxu0 0.0
  %580 = vmatprep.subr.mxu0 0.0
  %581 = vmatpush1.xpose.msra.mxu0 0.0
  %582 = vmatprep.subr.mxu0 0.0
  %583 = vmatpush1.xpose.msra.mxu0 0.0
  %584 = vmatprep.subr.mxu0 0.0
  %585 = vmatpush1.xpose.msra.mxu0 0.0
  %586 = vmatprep.subr.mxu0 0.0
  %587 = vmatpush1.xpose.msra.mxu0 0.0
  %588 = vmatprep.subr.mxu0 0.0
  %589 = vmatpush1.xpose.msra.mxu0 0.0
  %590 = vmatprep.subr.mxu0 0.0
  %591 = vmatpush1.xpose.msra.mxu0 0.0
  %592 = vmatprep.subr.mxu0 0.0
  %593 = vmatpush1.xpose.msra.mxu0 0.0
  %594 = vmatprep.subr.mxu0 0.0
  %595 = vmatpush1.xpose.msra.mxu0 0.0
  %596 = vmatprep.subr.mxu0 0.0
  %597 = vmatpush1.xpose.msra.mxu0 0.0
  %598 = vmatprep.subr.mxu0 0.0
  %599 = vmatpush1.xpose.msra.mxu0 0.0
  %600 = vmatprep.subr.mxu0 0.0
  %601 = vmatpush1.xpose.msra.mxu0 0.0
  %602 = vmatprep.subr.mxu0 0.0
  %603 = vmatpush1.xpose.msra.mxu0 0.0
  %604 = vmatprep.subr.mxu0 0.0
  %605 = vmatpush1.xpose.msra.mxu0 0.0
  %606 = vmatprep.subr.mxu0 0.0
  %607 = vmatpush1.xpose.msra.mxu0 0.0
  %608 = vmatprep.mubr.f32.mxu0 0.0
  %609 = vmatmul.mubr.f32.gmra.mrb[0].mxu0 %v540
  %v610 = vpop.f32.mrb[0].mxu0
  %v611 = vadd.f32 0.0, %v610
  %v612 = vpop.f32.mrb[0].mxu0
  %613 = vdwg.mxu0
  %v614 = vmul.f32 %v223, 0.35355338
  %v615 = vmul.f32 %v299, 0.35355338
  %v616 = vmul.f32 %v377, 0.35355338
  %v617 = vmul.f32 %v455, 0.35355338
  %v618 = vmul.f32 %v533, 0.35355338
  %v619 = vmul.f32 %v611, 0.35355338
  %v620 = vld [vmem:[%s3 + $0x8] sm:$0xff]
  %v621 = vsel %vm151, %v620, -inf
  %622 = vmax.xlane.f32.xlu0 %v621
  %v623 = vpop.xlane.xlu0 %622
  %v624 = vsel %vm151, %v614, -inf
  %625 = vmax.xlane.f32.xlu0 %v624
  %v626 = vpop.xlane.xlu0 %625
  %v627 = vsel %vm151, %v615, -inf
  %628 = vmax.xlane.f32.xlu0 %v627
  %v629 = vpop.xlane.xlu0 %628
  %v630 = vsel %vm151, %v616, -inf
  %631 = vmax.xlane.f32.xlu0 %v630
  %v632 = vpop.xlane.xlu0 %631
  %v633 = vsel %vm151, %v617, -inf
  %634 = vmax.xlane.f32.xlu0 %v633
  %v635 = vpop.xlane.xlu0 %634
  %v636 = vsel %vm151, %v618, -inf
  %637 = vmax.xlane.f32.xlu0 %v636
  %v638 = vpop.xlane.xlu0 %637
  %v639 = vsel %vm151, %v619, -inf
  %640 = vmax.xlane.f32.xlu0 %v639
  %v641 = vpop.xlane.xlu0 %640
  %v642 = vsub.f32 %v620, %v623
  %v643 = vsub.f32 %v614, %v626
  %v644 = vsub.f32 %v615, %v629
  %v645 = vsub.f32 %v616, %v632
  %v646 = vsub.f32 %v617, %v635
  %v647 = vsub.f32 %v618, %v638
  %v648 = vsub.f32 %v619, %v641
  %v649 = vmul.f32 %v642, 1.442695
  %v650 = vpow.pop %v649
  %v651 = vmul.f32 %v643, 1.442695
  %v652 = vpow.pop %v651
  %v653 = vmul.f32 %v644, 1.442695
  %v654 = vpow.pop %v653
  %v655 = vmul.f32 %v645, 1.442695
  %v656 = vpow.pop %v655
  %v657 = vmul.f32 %v646, 1.442695
  %v658 = vpow.pop %v657
  %v659 = vmul.f32 %v647, 1.442695
  %v660 = vpow.pop %v659
  %v661 = vmul.f32 %v648, 1.442695
  %v662 = vpow.pop %v661
  %v663 = vsel %vm151, %v650, 0.0
  %664 = vadd.xlane.f32.xlu0 %v663
  %v665 = vpop.xlane.xlu0 %664
  %v666 = vsel %vm151, %v652, 0.0
  %667 = vadd.xlane.f32.xlu0 %v666
  %v668 = vpop.xlane.xlu0 %667
  %v669 = vsel %vm151, %v654, 0.0
  %670 = vadd.xlane.f32.xlu0 %v669
  %v671 = vpop.xlane.xlu0 %670
  %v672 = vsel %vm151, %v656, 0.0
  %673 = vadd.xlane.f32.xlu0 %v672
  %v674 = vpop.xlane.xlu0 %673
  %v675 = vsel %vm151, %v658, 0.0
  %676 = vadd.xlane.f32.xlu0 %v675
  %v677 = vpop.xlane.xlu0 %676
  %v678 = vsel %vm151, %v660, 0.0
  %679 = vadd.xlane.f32.xlu0 %v678
  %v680 = vpop.xlane.xlu0 %679
  %v681 = vsel %vm151, %v662, 0.0
  %682 = vadd.xlane.f32.xlu0 %v681
  %v683 = vpop.xlane.xlu0 %682
  %v684 = vrcp.pop %v665
  %v685 = vmul.f32 %v650, %v684
  %v686 = vrcp.pop %v668
  %v687 = vmul.f32 %v652, %v686
  %v688 = vrcp.pop %v671
  %v689 = vmul.f32 %v654, %v688
  %v690 = vrcp.pop %v674
  %v691 = vmul.f32 %v656, %v690
  %v692 = vrcp.pop %v677
  %v693 = vmul.f32 %v658, %v692
  %v694 = vrcp.pop %v680
  %v695 = vmul.f32 %v660, %v694
  %v696 = vrcp.pop %v683
  %v697 = vmul.f32 %v662, %v696
  %698 = vst.msk [vmem:[%s5] sm:$0xff] %vm151, %v685
  %699 = vst.msk [vmem:[%s5 + $0x8] sm:$0xff] %vm151, %v685
  %700 = vst.msk [vmem:[%s5 + $0x10] sm:$0xff] %vm151, %v687
  %701 = vst.msk [vmem:[%s5 + $0x18] sm:$0xff] %vm151, %v689
  %702 = vst.msk [vmem:[%s5 + $0x20] sm:$0xff] %vm151, %v691
  %703 = vst.msk [vmem:[%s5 + $0x28] sm:$0xff] %vm151, %v693
  %704 = vst.msk [vmem:[%s5 + $0x30] sm:$0xff] %vm151, %v695
  %705 = vst.msk [vmem:[%s5 + $0x38] sm:$0xff] %vm151, %v697
  %706 = vrot.lane.b32.xlu0 %v127, 64
  %v707 = vpop.permute.xlu0 %706
  %v710 = vsel %vm151, %v685, 0
  %712 = vmatprep.subr.mxu0 0.0
  %713 = vmatpush1.msra.mxu0 %v707
  %714 = vmatprep.subr.mxu0 0.0
  %715 = vmatpush1.msra.mxu0 0.0
  %716 = vmatprep.subr.mxu0 0.0
  %717 = vmatpush1.msra.mxu0 0.0
  %718 = vmatprep.subr.mxu0 0.0
  %719 = vmatpush1.msra.mxu0 0.0
  %720 = vmatprep.subr.mxu0 0.0
  %721 = vmatpush1.msra.mxu0 0.0
  %722 = vmatprep.subr.mxu0 0.0
  %723 = vmatpush1.msra.mxu0 0.0
  %724 = vmatprep.subr.mxu0 0.0
  %725 = vmatpush1.msra.mxu0 0.0
  %726 = vmatprep.subr.mxu0 0.0
  %727 = vmatpush1.msra.mxu0 0.0
  %728 = vmatprep.subr.mxu0 0.0
  %729 = vmatpush1.msra.mxu0 0.0
  %730 = vmatprep.subr.mxu0 0.0
  %731 = vmatpush1.msra.mxu0 0.0
  %732 = vmatprep.subr.mxu0 0.0
  %733 = vmatpush1.msra.mxu0 0.0
  %734 = vmatprep.subr.mxu0 0.0
  %735 = vmatpush1.msra.mxu0 0.0
  %736 = vmatprep.subr.mxu0 0.0
  %737 = vmatpush1.msra.mxu0 0.0
  %738 = vmatprep.subr.mxu0 0.0
  %739 = vmatpush1.msra.mxu0 0.0
  %740 = vmatprep.subr.mxu0 0.0
  %741 = vmatpush1.msra.mxu0 0.0
  %742 = vmatprep.subr.mxu0 0.0
  %743 = vmatpush1.msra.mxu0 0.0
  %744 = vmatprep.subr.mxu0 0.0
  %745 = vmatpush1.msra.mxu0 0.0
  %746 = vmatprep.subr.mxu0 0.0
  %747 = vmatpush1.msra.mxu0 0.0
  %748 = vmatprep.subr.mxu0 0.0
  %749 = vmatpush1.msra.mxu0 0.0
  %750 = vmatprep.subr.mxu0 0.0
  %751 = vmatpush1.msra.mxu0 0.0
  %752 = vmatprep.subr.mxu0 0.0
  %753 = vmatpush1.msra.mxu0 0.0
  %754 = vmatprep.subr.mxu0 0.0
  %755 = vmatpush1.msra.mxu0 0.0
  %756 = vmatprep.subr.mxu0 0.0
  %757 = vmatpush1.msra.mxu0 0.0
  %758 = vmatprep.subr.mxu0 0.0
  %759 = vmatpush1.msra.mxu0 0.0
  %760 = vmatprep.subr.mxu0 0.0
  %761 = vmatpush1.msra.mxu0 0.0
  %762 = vmatprep.subr.mxu0 0.0
  %763 = vmatpush1.msra.mxu0 0.0
  %764 = vmatprep.subr.mxu0 0.0
  %765 = vmatpush1.msra.mxu0 0.0
  %766 = vmatprep.subr.mxu0 0.0
  %767 = vmatpush1.msra.mxu0 0.0
  %768 = vmatprep.subr.mxu0 0.0
  %769 = vmatpush1.msra.mxu0 0.0
  %770 = vmatprep.subr.mxu0 0.0
  %771 = vmatpush1.msra.mxu0 0.0
  %772 = vmatprep.subr.mxu0 0.0
  %773 = vmatpush1.msra.mxu0 0.0
  %774 = vmatprep.subr.mxu0 0.0
  %775 = vmatpush1.msra.mxu0 0.0
  %776 = vmatprep.mubr.f32.mxu0 0.0
  %777 = vmatmul.mubr.f32.gmra.mrb[0].mxu0 %v710
  %v778 = vpop.f32.mrb[0].mxu0
  %v779 = vadd.f32 0.0, %v778
  %v780 = vpop.f32.mrb[0].mxu0
  %781 = vdwg.mxu0
  %782 = vrot.lane.b32.xlu0 %v132, 64
  %v783 = vpop.permute.xlu0 %782
  %785 = vmatprep.subr.mxu0 0.0
  %786 = vmatpush1.msra.mxu0 %v783
  %787 = vmatprep.subr.mxu0 0.0
  %788 = vmatpush1.msra.mxu0 0.0
  %789 = vmatprep.subr.mxu0 0.0
  %790 = vmatpush1.msra.mxu0 0.0
  %791 = vmatprep.subr.mxu0 0.0
  %792 = vmatpush1.msra.mxu0 0.0
  %793 = vmatprep.subr.mxu0 0.0
  %794 = vmatpush1.msra.mxu0 0.0
  %795 = vmatprep.subr.mxu0 0.0
  %796 = vmatpush1.msra.mxu0 0.0
  %797 = vmatprep.subr.mxu0 0.0
  %798 = vmatpush1.msra.mxu0 0.0
  %799 = vmatprep.subr.mxu0 0.0
  %800 = vmatpush1.msra.mxu0 0.0
  %801 = vmatprep.subr.mxu0 0.0
  %802 = vmatpush1.msra.mxu0 0.0
  %803 = vmatprep.subr.mxu0 0.0
  %804 = vmatpush1.msra.mxu0 0.0
  %805 = vmatprep.subr.mxu0 0.0
  %806 = vmatpush1.msra.mxu0 0.0
  %807 = vmatprep.subr.mxu0 0.0
  %808 = vmatpush1.msra.mxu0 0.0
  %809 = vmatprep.subr.mxu0 0.0
  %810 = vmatpush1.msra.mxu0 0.0
  %811 = vmatprep.subr.mxu0 0.0
  %812 = vmatpush1.msra.mxu0 0.0
  %813 = vmatprep.subr.mxu0 0.0
  %814 = vmatpush1.msra.mxu0 0.0
  %815 = vmatprep.subr.mxu0 0.0
  %816 = vmatpush1.msra.mxu0 0.0
  %817 = vmatprep.subr.mxu0 0.0
  %818 = vmatpush1.msra.mxu0 0.0
  %819 = vmatprep.subr.mxu0 0.0
  %820 = vmatpush1.msra.mxu0 0.0
  %821 = vmatprep.subr.mxu0 0.0
  %822 = vmatpush1.msra.mxu0 0.0
  %823 = vmatprep.subr.mxu0 0.0
  %824 = vmatpush1.msra.mxu0 0.0
  %825 = vmatprep.subr.mxu0 0.0
  %826 = vmatpush1.msra.mxu0 0.0
  %827 = vmatprep.subr.mxu0 0.0
  %828 = vmatpush1.msra.mxu0 0.0
  %829 = vmatprep.subr.mxu0 0.0
  %830 = vmatpush1.msra.mxu0 0.0
  %831 = vmatprep.subr.mxu0 0.0
  %832 = vmatpush1.msra.mxu0 0.0
  %833 = vmatprep.subr.mxu0 0.0
  %834 = vmatpush1.msra.mxu0 0.0
  %835 = vmatprep.subr.mxu0 0.0
  %836 = vmatpush1.msra.mxu0 0.0
  %837 = vmatprep.subr.mxu0 0.0
  %838 = vmatpush1.msra.mxu0 0.0
  %839 = vmatprep.subr.mxu0 0.0
  %840 = vmatpush1.msra.mxu0 0.0
  %841 = vmatprep.subr.mxu0 0.0
  %842 = vmatpush1.msra.mxu0 0.0
  %843 = vmatprep.subr.mxu0 0.0
  %844 = vmatpush1.msra.mxu0 0.0
  %845 = vmatprep.subr.mxu0 0.0
  %846 = vmatpush1.msra.mxu0 0.0
  %847 = vmatprep.subr.mxu0 0.0
  %848 = vmatpush1.msra.mxu0 0.0
  %849 = vmatprep.mubr.f32.mxu0 0.0
  %850 = vmatmul.mubr.f32.gmra.mrb[0].mxu0 %v710
  %v851 = vpop.f32.mrb[0].mxu0
  %v852 = vadd.f32 0.0, %v851
  %v853 = vpop.f32.mrb[0].mxu0
  %854 = vdwg.mxu0
  %855 = vrot.lane.b32.xlu0 %v138, 64
  %v856 = vpop.permute.xlu0 %855
  %v859 = vsel %vm151, %v687, 0
  %861 = vmatprep.subr.mxu0 0.0
  %862 = vmatpush1.msra.mxu0 %v856
  %863 = vmatprep.subr.mxu0 0.0
  %864 = vmatpush1.msra.mxu0 0.0
  %865 = vmatprep.subr.mxu0 0.0
  %866 = vmatpush1.msra.mxu0 0.0
  %867 = vmatprep.subr.mxu0 0.0
  %868 = vmatpush1.msra.mxu0 0.0
  %869 = vmatprep.subr.mxu0 0.0
  %870 = vmatpush1.msra.mxu0 0.0
  %871 = vmatprep.subr.mxu0 0.0
  %872 = vmatpush1.msra.mxu0 0.0
  %873 = vmatprep.subr.mxu0 0.0
  %874 = vmatpush1.msra.mxu0 0.0
  %875 = vmatprep.subr.mxu0 0.0
  %876 = vmatpush1.msra.mxu0 0.0
  %877 = vmatprep.subr.mxu0 0.0
  %878 = vmatpush1.msra.mxu0 0.0
  %879 = vmatprep.subr.mxu0 0.0
  %880 = vmatpush1.msra.mxu0 0.0
  %881 = vmatprep.subr.mxu0 0.0
  %882 = vmatpush1.msra.mxu0 0.0
  %883 = vmatprep.subr.mxu0 0.0
  %884 = vmatpush1.msra.mxu0 0.0
  %885 = vmatprep.subr.mxu0 0.0
  %886 = vmatpush1.msra.mxu0 0.0
  %887 = vmatprep.subr.mxu0 0.0
  %888 = vmatpush1.msra.mxu0 0.0
  %889 = vmatprep.subr.mxu0 0.0
  %890 = vmatpush1.msra.mxu0 0.0
  %891 = vmatprep.subr.mxu0 0.0
  %892 = vmatpush1.msra.mxu0 0.0
  %893 = vmatprep.subr.mxu0 0.0
  %894 = vmatpush1.msra.mxu0 0.0
  %895 = vmatprep.subr.mxu0 0.0
  %896 = vmatpush1.msra.mxu0 0.0
  %897 = vmatprep.subr.mxu0 0.0
  %898 = vmatpush1.msra.mxu0 0.0
  %899 = vmatprep.subr.mxu0 0.0
  %900 = vmatpush1.msra.mxu0 0.0
  %901 = vmatprep.subr.mxu0 0.0
  %902 = vmatpush1.msra.mxu0 0.0
  %903 = vmatprep.subr.mxu0 0.0
  %904 = vmatpush1.msra.mxu0 0.0
  %905 = vmatprep.subr.mxu0 0.0
  %906 = vmatpush1.msra.mxu0 0.0
  %907 = vmatprep.subr.mxu0 0.0
  %908 = vmatpush1.msra.mxu0 0.0
  %909 = vmatprep.subr.mxu0 0.0
  %910 = vmatpush1.msra.mxu0 0.0
  %911 = vmatprep.subr.mxu0 0.0
  %912 = vmatpush1.msra.mxu0 0.0
  %913 = vmatprep.subr.mxu0 0.0
  %914 = vmatpush1.msra.mxu0 0.0
  %915 = vmatprep.subr.mxu0 0.0
  %916 = vmatpush1.msra.mxu0 0.0
  %917 = vmatprep.subr.mxu0 0.0
  %918 = vmatpush1.msra.mxu0 0.0
  %919 = vmatprep.subr.mxu0 0.0
  %920 = vmatpush1.msra.mxu0 0.0
  %921 = vmatprep.subr.mxu0 0.0
  %922 = vmatpush1.msra.mxu0 0.0
  %923 = vmatprep.subr.mxu0 0.0
  %924 = vmatpush1.msra.mxu0 0.0
  %925 = vmatprep.mubr.f32.mxu0 0.0
  %926 = vmatmul.mubr.f32.gmra.mrb[0].mxu0 %v859
  %v927 = vpop.f32.mrb[0].mxu0
  %v928 = vadd.f32 0.0, %v927
  %v929 = vpop.f32.mrb[0].mxu0
  %930 = vdwg.mxu0
  %931 = vrot.lane.b32.xlu0 %v140, 64
  %v932 = vpop.permute.xlu0 %931
  %v935 = vsel %vm151, %v689, 0
  %937 = vmatprep.subr.mxu0 0.0
  %938 = vmatpush1.msra.mxu0 %v932
  %939 = vmatprep.subr.mxu0 0.0
  %940 = vmatpush1.msra.mxu0 0.0
  %941 = vmatprep.subr.mxu0 0.0
  %942 = vmatpush1.msra.mxu0 0.0
  %943 = vmatprep.subr.mxu0 0.0
  %944 = vmatpush1.msra.mxu0 0.0
  %945 = vmatprep.subr.mxu0 0.0
  %946 = vmatpush1.msra.mxu0 0.0
  %947 = vmatprep.subr.mxu0 0.0
  %948 = vmatpush1.msra.mxu0 0.0
  %949 = vmatprep.subr.mxu0 0.0
  %950 = vmatpush1.msra.mxu0 0.0
  %951 = vmatprep.subr.mxu0 0.0
  %952 = vmatpush1.msra.mxu0 0.0
  %953 = vmatprep.subr.mxu0 0.0
  %954 = vmatpush1.msra.mxu0 0.0
  %955 = vmatprep.subr.mxu0 0.0
  %956 = vmatpush1.msra.mxu0 0.0
  %957 = vmatprep.subr.mxu0 0.0
  %958 = vmatpush1.msra.mxu0 0.0
  %959 = vmatprep.subr.mxu0 0.0
  %960 = vmatpush1.msra.mxu0 0.0
  %961 = vmatprep.subr.mxu0 0.0
  %962 = vmatpush1.msra.mxu0 0.0
  %963 = vmatprep.subr.mxu0 0.0
  %964 = vmatpush1.msra.mxu0 0.0
  %965 = vmatprep.subr.mxu0 0.0
  %966 = vmatpush1.msra.mxu0 0.0
  %967 = vmatprep.subr.mxu0 0.0
  %968 = vmatpush1.msra.mxu0 0.0
  %969 = vmatprep.subr.mxu0 0.0
  %970 = vmatpush1.msra.mxu0 0.0
  %971 = vmatprep.subr.mxu0 0.0
  %972 = vmatpush1.msra.mxu0 0.0
  %973 = vmatprep.subr.mxu0 0.0
  %974 = vmatpush1.msra.mxu0 0.0
  %975 = vmatprep.subr.mxu0 0.0
  %976 = vmatpush1.msra.mxu0 0.0
  %977 = vmatprep.subr.mxu0 0.0
  %978 = vmatpush1.msra.mxu0 0.0
  %979 = vmatprep.subr.mxu0 0.0
  %980 = vmatpush1.msra.mxu0 0.0
  %981 = vmatprep.subr.mxu0 0.0
  %982 = vmatpush1.msra.mxu0 0.0
  %983 = vmatprep.subr.mxu0 0.0
  %984 = vmatpush1.msra.mxu0 0.0
  %985 = vmatprep.subr.mxu0 0.0
  %986 = vmatpush1.msra.mxu0 0.0
  %987 = vmatprep.subr.mxu0 0.0
  %988 = vmatpush1.msra.mxu0 0.0
  %989 = vmatprep.subr.mxu0 0.0
  %990 = vmatpush1.msra.mxu0 0.0
  %991 = vmatprep.subr.mxu0 0.0
  %992 = vmatpush1.msra.mxu0 0.0
  %993 = vmatprep.subr.mxu0 0.0
  %994 = vmatpush1.msra.mxu0 0.0
  %995 = vmatprep.subr.mxu0 0.0
  %996 = vmatpush1.msra.mxu0 0.0
  %997 = vmatprep.subr.mxu0 0.0
  %998 = vmatpush1.msra.mxu0 0.0
  %999 = vmatprep.subr.mxu0 0.0
  %1000 = vmatpush1.msra.mxu0 0.0
  %1001 = vmatprep.mubr.f32.mxu0 0.0
  %1002 = vmatmul.mubr.f32.gmra.mrb[0].mxu0 %v935
  %v1003 = vpop.f32.mrb[0].mxu0
  %v1004 = vadd.f32 0.0, %v1003
  %v1005 = vpop.f32.mrb[0].mxu0
  %1006 = vdwg.mxu0
  %1007 = vrot.lane.b32.xlu0 %v142, 64
  %v1008 = vpop.permute.xlu0 %1007
  %v1011 = vsel %vm151, %v691, 0
  %1013 = vmatprep.subr.mxu0 0.0
  %1014 = vmatpush1.msra.mxu0 %v1008
  %1015 = vmatprep.subr.mxu0 0.0
  %1016 = vmatpush1.msra.mxu0 0.0
  %1017 = vmatprep.subr.mxu0 0.0
  %1018 = vmatpush1.msra.mxu0 0.0
  %1019 = vmatprep.subr.mxu0 0.0
  %1020 = vmatpush1.msra.mxu0 0.0
  %1021 = vmatprep.subr.mxu0 0.0
  %1022 = vmatpush1.msra.mxu0 0.0
  %1023 = vmatprep.subr.mxu0 0.0
  %1024 = vmatpush1.msra.mxu0 0.0
  %1025 = vmatprep.subr.mxu0 0.0
  %1026 = vmatpush1.msra.mxu0 0.0
  %1027 = vmatprep.subr.mxu0 0.0
  %1028 = vmatpush1.msra.mxu0 0.0
  %1029 = vmatprep.subr.mxu0 0.0
  %1030 = vmatpush1.msra.mxu0 0.0
  %1031 = vmatprep.subr.mxu0 0.0
  %1032 = vmatpush1.msra.mxu0 0.0
  %1033 = vmatprep.subr.mxu0 0.0
  %1034 = vmatpush1.msra.mxu0 0.0
  %1035 = vmatprep.subr.mxu0 0.0
  %1036 = vmatpush1.msra.mxu0 0.0
  %1037 = vmatprep.subr.mxu0 0.0
  %1038 = vmatpush1.msra.mxu0 0.0
  %1039 = vmatprep.subr.mxu0 0.0
  %1040 = vmatpush1.msra.mxu0 0.0
  %1041 = vmatprep.subr.mxu0 0.0
  %1042 = vmatpush1.msra.mxu0 0.0
  %1043 = vmatprep.subr.mxu0 0.0
  %1044 = vmatpush1.msra.mxu0 0.0
  %1045 = vmatprep.subr.mxu0 0.0
  %1046 = vmatpush1.msra.mxu0 0.0
  %1047 = vmatprep.subr.mxu0 0.0
  %1048 = vmatpush1.msra.mxu0 0.0
  %1049 = vmatprep.subr.mxu0 0.0
  %1050 = vmatpush1.msra.mxu0 0.0
  %1051 = vmatprep.subr.mxu0 0.0
  %1052 = vmatpush1.msra.mxu0 0.0
  %1053 = vmatprep.subr.mxu0 0.0
  %1054 = vmatpush1.msra.mxu0 0.0
  %1055 = vmatprep.subr.mxu0 0.0
  %1056 = vmatpush1.msra.mxu0 0.0
  %1057 = vmatprep.subr.mxu0 0.0
  %1058 = vmatpush1.msra.mxu0 0.0
  %1059 = vmatprep.subr.mxu0 0.0
  %1060 = vmatpush1.msra.mxu0 0.0
  %1061 = vmatprep.subr.mxu0 0.0
  %1062 = vmatpush1.msra.mxu0 0.0
  %1063 = vmatprep.subr.mxu0 0.0
  %1064 = vmatpush1.msra.mxu0 0.0
  %1065 = vmatprep.subr.mxu0 0.0
  %1066 = vmatpush1.msra.mxu0 0.0
  %1067 = vmatprep.subr.mxu0 0.0
  %1068 = vmatpush1.msra.mxu0 0.0
  %1069 = vmatprep.subr.mxu0 0.0
  %1070 = vmatpush1.msra.mxu0 0.0
  %1071 = vmatprep.subr.mxu0 0.0
  %1072 = vmatpush1.msra.mxu0 0.0
  %1073 = vmatprep.subr.mxu0 0.0
  %1074 = vmatpush1.msra.mxu0 0.0
  %1075 = vmatprep.subr.mxu0 0.0
  %1076 = vmatpush1.msra.mxu0 0.0
  %1077 = vmatprep.mubr.f32.mxu0 0.0
  %1078 = vmatmul.mubr.f32.gmra.mrb[0].mxu0 %v1011
  %v1079 = vpop.f32.mrb[0].mxu0
  %v1080 = vadd.f32 0.0, %v1079
  %v1081 = vpop.f32.mrb[0].mxu0
  %1082 = vdwg.mxu0
  %1083 = vrot.lane.b32.xlu0 %v144, 64
  %v1084 = vpop.permute.xlu0 %1083
  %v1087 = vsel %vm151, %v693, 0
  %1089 = vmatprep.subr.mxu0 0.0
  %1090 = vmatpush1.msra.mxu0 %v1084
  %1091 = vmatprep.subr.mxu0 0.0
  %1092 = vmatpush1.msra.mxu0 0.0
  %1093 = vmatprep.subr.mxu0 0.0
  %1094 = vmatpush1.msra.mxu0 0.0
  %1095 = vmatprep.subr.mxu0 0.0
  %1096 = vmatpush1.msra.mxu0 0.0
  %1097 = vmatprep.subr.mxu0 0.0
  %1098 = vmatpush1.msra.mxu0 0.0
  %1099 = vmatprep.subr.mxu0 0.0
  %1100 = vmatpush1.msra.mxu0 0.0
  %1101 = vmatprep.subr.mxu0 0.0
  %1102 = vmatpush1.msra.mxu0 0.0
  %1103 = vmatprep.subr.mxu0 0.0
  %1104 = vmatpush1.msra.mxu0 0.0
  %1105 = vmatprep.subr.mxu0 0.0
  %1106 = vmatpush1.msra.mxu0 0.0
  %1107 = vmatprep.subr.mxu0 0.0
  %1108 = vmatpush1.msra.mxu0 0.0
  %1109 = vmatprep.subr.mxu0 0.0
  %1110 = vmatpush1.msra.mxu0 0.0
  %1111 = vmatprep.subr.mxu0 0.0
  %1112 = vmatpush1.msra.mxu0 0.0
  %1113 = vmatprep.subr.mxu0 0.0
  %1114 = vmatpush1.msra.mxu0 0.0
  %1115 = vmatprep.subr.mxu0 0.0
  %1116 = vmatpush1.msra.mxu0 0.0
  %1117 = vmatprep.subr.mxu0 0.0
  %1118 = vmatpush1.msra.mxu0 0.0
  %1119 = vmatprep.subr.mxu0 0.0
  %1120 = vmatpush1.msra.mxu0 0.0
  %1121 = vmatprep.subr.mxu0 0.0
  %1122 = vmatpush1.msra.mxu0 0.0
  %1123 = vmatprep.subr.mxu0 0.0
  %1124 = vmatpush1.msra.mxu0 0.0
  %1125 = vmatprep.subr.mxu0 0.0
  %1126 = vmatpush1.msra.mxu0 0.0
  %1127 = vmatprep.subr.mxu0 0.0
  %1128 = vmatpush1.msra.mxu0 0.0
  %1129 = vmatprep.subr.mxu0 0.0
  %1130 = vmatpush1.msra.mxu0 0.0
  %1131 = vmatprep.subr.mxu0 0.0
  %1132 = vmatpush1.msra.mxu0 0.0
  %1133 = vmatprep.subr.mxu0 0.0
  %1134 = vmatpush1.msra.mxu0 0.0
  %1135 = vmatprep.subr.mxu0 0.0
  %1136 = vmatpush1.msra.mxu0 0.0
  %1137 = vmatprep.subr.mxu0 0.0
  %1138 = vmatpush1.msra.mxu0 0.0
  %1139 = vmatprep.subr.mxu0 0.0
  %1140 = vmatpush1.msra.mxu0 0.0
  %1141 = vmatprep.subr.mxu0 0.0
  %1142 = vmatpush1.msra.mxu0 0.0
  %1143 = vmatprep.subr.mxu0 0.0
  %1144 = vmatpush1.msra.mxu0 0.0
  %1145 = vmatprep.subr.mxu0 0.0
  %1146 = vmatpush1.msra.mxu0 0.0
  %1147 = vmatprep.subr.mxu0 0.0
  %1148 = vmatpush1.msra.mxu0 0.0
  %1149 = vmatprep.subr.mxu0 0.0
  %1150 = vmatpush1.msra.mxu0 0.0
  %1151 = vmatprep.subr.mxu0 0.0
  %1152 = vmatpush1.msra.mxu0 0.0
  %1153 = vmatprep.mubr.f32.mxu0 0.0
  %1154 = vmatmul.mubr.f32.gmra.mrb[0].mxu0 %v1087
  %v1155 = vpop.f32.mrb[0].mxu0
  %v1156 = vadd.f32 0.0, %v1155
  %v1157 = vpop.f32.mrb[0].mxu0
  %1158 = vdwg.mxu0
  %1159 = vrot.lane.b32.xlu0 %v146, 64
  %v1160 = vpop.permute.xlu0 %1159
  %v1163 = vsel %vm151, %v695, 0
  %1165 = vmatprep.subr.mxu0 0.0
  %1166 = vmatpush1.msra.mxu0 %v1160
  %1167 = vmatprep.subr.mxu0 0.0
  %1168 = vmatpush1.msra.mxu0 0.0
  %1169 = vmatprep.subr.mxu0 0.0
  %1170 = vmatpush1.msra.mxu0 0.0
  %1171 = vmatprep.subr.mxu0 0.0
  %1172 = vmatpush1.msra.mxu0 0.0
  %1173 = vmatprep.subr.mxu0 0.0
  %1174 = vmatpush1.msra.mxu0 0.0
  %1175 = vmatprep.subr.mxu0 0.0
  %1176 = vmatpush1.msra.mxu0 0.0
  %1177 = vmatprep.subr.mxu0 0.0
  %1178 = vmatpush1.msra.mxu0 0.0
  %1179 = vmatprep.subr.mxu0 0.0
  %1180 = vmatpush1.msra.mxu0 0.0
  %1181 = vmatprep.subr.mxu0 0.0
  %1182 = vmatpush1.msra.mxu0 0.0
  %1183 = vmatprep.subr.mxu0 0.0
  %1184 = vmatpush1.msra.mxu0 0.0
  %1185 = vmatprep.subr.mxu0 0.0
  %1186 = vmatpush1.msra.mxu0 0.0
  %1187 = vmatprep.subr.mxu0 0.0
  %1188 = vmatpush1.msra.mxu0 0.0
  %1189 = vmatprep.subr.mxu0 0.0
  %1190 = vmatpush1.msra.mxu0 0.0
  %1191 = vmatprep.subr.mxu0 0.0
  %1192 = vmatpush1.msra.mxu0 0.0
  %1193 = vmatprep.subr.mxu0 0.0
  %1194 = vmatpush1.msra.mxu0 0.0
  %1195 = vmatprep.subr.mxu0 0.0
  %1196 = vmatpush1.msra.mxu0 0.0
  %1197 = vmatprep.subr.mxu0 0.0
  %1198 = vmatpush1.msra.mxu0 0.0
  %1199 = vmatprep.subr.mxu0 0.0
  %1200 = vmatpush1.msra.mxu0 0.0
  %1201 = vmatprep.subr.mxu0 0.0
  %1202 = vmatpush1.msra.mxu0 0.0
  %1203 = vmatprep.subr.mxu0 0.0
  %1204 = vmatpush1.msra.mxu0 0.0
  %1205 = vmatprep.subr.mxu0 0.0
  %1206 = vmatpush1.msra.mxu0 0.0
  %1207 = vmatprep.subr.mxu0 0.0
  %1208 = vmatpush1.msra.mxu0 0.0
  %1209 = vmatprep.subr.mxu0 0.0
  %1210 = vmatpush1.msra.mxu0 0.0
  %1211 = vmatprep.subr.mxu0 0.0
  %1212 = vmatpush1.msra.mxu0 0.0
  %1213 = vmatprep.subr.mxu0 0.0
  %1214 = vmatpush1.msra.mxu0 0.0
  %1215 = vmatprep.subr.mxu0 0.0
  %1216 = vmatpush1.msra.mxu0 0.0
  %1217 = vmatprep.subr.mxu0 0.0
  %1218 = vmatpush1.msra.mxu0 0.0
  %1219 = vmatprep.subr.mxu0 0.0
  %1220 = vmatpush1.msra.mxu0 0.0
  %1221 = vmatprep.subr.mxu0 0.0
  %1222 = vmatpush1.msra.mxu0 0.0
  %1223 = vmatprep.subr.mxu0 0.0
  %1224 = vmatpush1.msra.mxu0 0.0
  %1225 = vmatprep.subr.mxu0 0.0
  %1226 = vmatpush1.msra.mxu0 0.0
  %1227 = vmatprep.subr.mxu0 0.0
  %1228 = vmatpush1.msra.mxu0 0.0
  %1229 = vmatprep.mubr.f32.mxu0 0.0
  %1230 = vmatmul.mubr.f32.gmra.mrb[0].mxu0 %v1163
  %v1231 = vpop.f32.mrb[0].mxu0
  %v1232 = vadd.f32 0.0, %v1231
  %v1233 = vpop.f32.mrb[0].mxu0
  %1234 = vdwg.mxu0
  %1235 = vrot.lane.b32.xlu0 %v148, 64
  %v1236 = vpop.permute.xlu0 %1235
  %v1239 = vsel %vm151, %v697, 0
  %1241 = vmatprep.subr.mxu0 0.0
  %1242 = vmatpush1.msra.mxu0 %v1236
  %1243 = vmatprep.subr.mxu0 0.0
  %1244 = vmatpush1.msra.mxu0 0.0
  %1245 = vmatprep.subr.mxu0 0.0
  %1246 = vmatpush1.msra.mxu0 0.0
  %1247 = vmatprep.subr.mxu0 0.0
  %1248 = vmatpush1.msra.mxu0 0.0
  %1249 = vmatprep.subr.mxu0 0.0
  %1250 = vmatpush1.msra.mxu0 0.0
  %1251 = vmatprep.subr.mxu0 0.0
  %1252 = vmatpush1.msra.mxu0 0.0
  %1253 = vmatprep.subr.mxu0 0.0
  %1254 = vmatpush1.msra.mxu0 0.0
  %1255 = vmatprep.subr.mxu0 0.0
  %1256 = vmatpush1.msra.mxu0 0.0
  %1257 = vmatprep.subr.mxu0 0.0
  %1258 = vmatpush1.msra.mxu0 0.0
  %1259 = vmatprep.subr.mxu0 0.0
  %1260 = vmatpush1.msra.mxu0 0.0
  %1261 = vmatprep.subr.mxu0 0.0
  %1262 = vmatpush1.msra.mxu0 0.0
  %1263 = vmatprep.subr.mxu0 0.0
  %1264 = vmatpush1.msra.mxu0 0.0
  %1265 = vmatprep.subr.mxu0 0.0
  %1266 = vmatpush1.msra.mxu0 0.0
  %1267 = vmatprep.subr.mxu0 0.0
  %1268 = vmatpush1.msra.mxu0 0.0
  %1269 = vmatprep.subr.mxu0 0.0
  %1270 = vmatpush1.msra.mxu0 0.0
  %1271 = vmatprep.subr.mxu0 0.0
  %1272 = vmatpush1.msra.mxu0 0.0
  %1273 = vmatprep.subr.mxu0 0.0
  %1274 = vmatpush1.msra.mxu0 0.0
  %1275 = vmatprep.subr.mxu0 0.0
  %1276 = vmatpush1.msra.mxu0 0.0
  %1277 = vmatprep.subr.mxu0 0.0
  %1278 = vmatpush1.msra.mxu0 0.0
  %1279 = vmatprep.subr.mxu0 0.0
  %1280 = vmatpush1.msra.mxu0 0.0
  %1281 = vmatprep.subr.mxu0 0.0
  %1282 = vmatpush1.msra.mxu0 0.0
  %1283 = vmatprep.subr.mxu0 0.0
  %1284 = vmatpush1.msra.mxu0 0.0
  %1285 = vmatprep.subr.mxu0 0.0
  %1286 = vmatpush1.msra.mxu0 0.0
  %1287 = vmatprep.subr.mxu0 0.0
  %1288 = vmatpush1.msra.mxu0 0.0
  %1289 = vmatprep.subr.mxu0 0.0
  %1290 = vmatpush1.msra.mxu0 0.0
  %1291 = vmatprep.subr.mxu0 0.0
  %1292 = vmatpush1.msra.mxu0 0.0
  %1293 = vmatprep.subr.mxu0 0.0
  %1294 = vmatpush1.msra.mxu0 0.0
  %1295 = vmatprep.subr.mxu0 0.0
  %1296 = vmatpush1.msra.mxu0 0.0
  %1297 = vmatprep.subr.mxu0 0.0
  %1298 = vmatpush1.msra.mxu0 0.0
  %1299 = vmatprep.subr.mxu0 0.0
  %1300 = vmatpush1.msra.mxu0 0.0
  %1301 = vmatprep.subr.mxu0 0.0
  %1302 = vmatpush1.msra.mxu0 0.0
  %1303 = vmatprep.subr.mxu0 0.0
  %1304 = vmatpush1.msra.mxu0 0.0
  %1305 = vmatprep.mubr.f32.mxu0 0.0
  %1306 = vmatmul.mubr.f32.gmra.mrb[0].mxu0 %v1239
  %v1307 = vpop.f32.mrb[0].mxu0
  %v1308 = vadd.f32 0.0, %v1307
  %v1309 = vpop.f32.mrb[0].mxu0
  %1310 = vdwg.mxu0
  %v1312 = vsel %vm151, %v928, 0
  %v1315 = vsel %vm151, %v1004, 0
  %1317 = vmatprep.subr.mxu0 0.0
  %1318 = vmatpush1.msra.mxu0 %v26
  %1319 = vmatprep.subr.mxu0 0.0
  %1320 = vmatpush1.msra.mxu0 0.0
  %1321 = vmatprep.subr.mxu0 0.0
  %1322 = vmatpush1.msra.mxu0 0.0
  %1323 = vmatprep.subr.mxu0 0.0
  %1324 = vmatpush1.msra.mxu0 0.0
  %1325 = vmatprep.subr.mxu0 0.0
  %1326 = vmatpush1.msra.mxu0 0.0
  %1327 = vmatprep.subr.mxu0 0.0
  %1328 = vmatpush1.msra.mxu0 0.0
  %1329 = vmatprep.subr.mxu0 0.0
  %1330 = vmatpush1.msra.mxu0 0.0
  %1331 = vmatprep.subr.mxu0 0.0
  %1332 = vmatpush1.msra.mxu0 0.0
  %1333 = vmatprep.subr.mxu0 0.0
  %1334 = vmatpush1.msra.mxu0 0.0
  %1335 = vmatprep.subr.mxu0 0.0
  %1336 = vmatpush1.msra.mxu0 0.0
  %1337 = vmatprep.subr.mxu0 0.0
  %1338 = vmatpush1.msra.mxu0 0.0
  %1339 = vmatprep.subr.mxu0 0.0
  %1340 = vmatpush1.msra.mxu0 0.0
  %1341 = vmatprep.subr.mxu0 0.0
  %1342 = vmatpush1.msra.mxu0 0.0
  %1343 = vmatprep.subr.mxu0 0.0
  %1344 = vmatpush1.msra.mxu0 0.0
  %1345 = vmatprep.subr.mxu0 0.0
  %1346 = vmatpush1.msra.mxu0 0.0
  %1347 = vmatprep.subr.mxu0 0.0
  %1348 = vmatpush1.msra.mxu0 0.0
  %1349 = vmatprep.subr.mxu0 0.0
  %1350 = vmatpush1.msra.mxu0 0.0
  %1351 = vmatprep.subr.mxu0 0.0
  %1352 = vmatpush1.msra.mxu0 0.0
  %1353 = vmatprep.subr.mxu0 0.0
  %1354 = vmatpush1.msra.mxu0 0.0
  %1355 = vmatprep.subr.mxu0 0.0
  %1356 = vmatpush1.msra.mxu0 0.0
  %1357 = vmatprep.subr.mxu0 0.0
  %1358 = vmatpush1.msra.mxu0 0.0
  %1359 = vmatprep.subr.mxu0 0.0
  %1360 = vmatpush1.msra.mxu0 0.0
  %1361 = vmatprep.subr.mxu0 0.0
  %1362 = vmatpush1.msra.mxu0 0.0
  %1363 = vmatprep.subr.mxu0 0.0
  %1364 = vmatpush1.msra.mxu0 0.0
  %1365 = vmatprep.subr.mxu0 0.0
  %1366 = vmatpush1.msra.mxu0 0.0
  %1367 = vmatprep.subr.mxu0 0.0
  %1368 = vmatpush1.msra.mxu0 0.0
  %1369 = vmatprep.subr.mxu0 0.0
  %1370 = vmatpush1.msra.mxu0 0.0
  %1371 = vmatprep.subr.mxu0 0.0
  %1372 = vmatpush1.msra.mxu0 0.0
  %1373 = vmatprep.subr.mxu0 0.0
  %1374 = vmatpush1.msra.mxu0 0.0
  %1375 = vmatprep.subr.mxu0 0.0
  %1376 = vmatpush1.msra.mxu0 0.0
  %1377 = vmatprep.subr.mxu0 0.0
  %1378 = vmatpush1.msra.mxu0 0.0
  %1379 = vmatprep.subr.mxu0 0.0
  %1380 = vmatpush1.msra.mxu0 0.0
  %1381 = vmatprep.mubr.f32.mxu0 0.0
  %1382 = vmatmul.mubr.f32.gmra.mrb[0].mxu0 %v1312
  %v1383 = vpop.f32.mrb[0].mxu0
  %v1384 = vadd.f32 0.0, %v1383
  %v1385 = vpop.f32.mrb[0].mxu0
  %1386 = vmatprep.mubr.f32.mxu0 0.0
  %1387 = vmatmul.mubr.f32.gmra.mrb[0].mxu0 %v1315
  %v1388 = vpop.f32.mrb[0].mxu0
  %v1389 = vadd.f32 0.0, %v1388
  %v1390 = vpop.f32.mrb[0].mxu0
  %1391 = vdwg.mxu0
  %v1393 = vsel %vm151, %v779, 0
  %v1396 = vsel %vm151, %v852, 0
  %1398 = vmatprep.subr.mxu0 0.0
  %1399 = vmatpush1.msra.mxu0 %v25
  %1400 = vmatprep.subr.mxu0 0.0
  %1401 = vmatpush1.msra.mxu0 0.0
  %1402 = vmatprep.subr.mxu0 0.0
  %1403 = vmatpush1.msra.mxu0 0.0
  %1404 = vmatprep.subr.mxu0 0.0
  %1405 = vmatpush1.msra.mxu0 0.0
  %1406 = vmatprep.subr.mxu0 0.0
  %1407 = vmatpush1.msra.mxu0 0.0
  %1408 = vmatprep.subr.mxu0 0.0
  %1409 = vmatpush1.msra.mxu0 0.0
  %1410 = vmatprep.subr.mxu0 0.0
  %1411 = vmatpush1.msra.mxu0 0.0
  %1412 = vmatprep.subr.mxu0 0.0
  %1413 = vmatpush1.msra.mxu0 0.0
  %1414 = vmatprep.subr.mxu0 0.0
  %1415 = vmatpush1.msra.mxu0 0.0
  %1416 = vmatprep.subr.mxu0 0.0
  %1417 = vmatpush1.msra.mxu0 0.0
  %1418 = vmatprep.subr.mxu0 0.0
  %1419 = vmatpush1.msra.mxu0 0.0
  %1420 = vmatprep.subr.mxu0 0.0
  %1421 = vmatpush1.msra.mxu0 0.0
  %1422 = vmatprep.subr.mxu0 0.0
  %1423 = vmatpush1.msra.mxu0 0.0
  %1424 = vmatprep.subr.mxu0 0.0
  %1425 = vmatpush1.msra.mxu0 0.0
  %1426 = vmatprep.subr.mxu0 0.0
  %1427 = vmatpush1.msra.mxu0 0.0
  %1428 = vmatprep.subr.mxu0 0.0
  %1429 = vmatpush1.msra.mxu0 0.0
  %1430 = vmatprep.subr.mxu0 0.0
  %1431 = vmatpush1.msra.mxu0 0.0
  %1432 = vmatprep.subr.mxu0 0.0
  %1433 = vmatpush1.msra.mxu0 0.0
  %1434 = vmatprep.subr.mxu0 0.0
  %1435 = vmatpush1.msra.mxu0 0.0
  %1436 = vmatprep.subr.mxu0 0.0
  %1437 = vmatpush1.msra.mxu0 0.0
  %1438 = vmatprep.subr.mxu0 0.0
  %1439 = vmatpush1.msra.mxu0 0.0
  %1440 = vmatprep.subr.mxu0 0.0
  %1441 = vmatpush1.msra.mxu0 0.0
  %1442 = vmatprep.subr.mxu0 0.0
  %1443 = vmatpush1.msra.mxu0 0.0
  %1444 = vmatprep.subr.mxu0 0.0
  %1445 = vmatpush1.msra.mxu0 0.0
  %1446 = vmatprep.subr.mxu0 0.0
  %1447 = vmatpush1.msra.mxu0 0.0
  %1448 = vmatprep.subr.mxu0 0.0
  %1449 = vmatpush1.msra.mxu0 0.0
  %1450 = vmatprep.subr.mxu0 0.0
  %1451 = vmatpush1.msra.mxu0 0.0
  %1452 = vmatprep.subr.mxu0 0.0
  %1453 = vmatpush1.msra.mxu0 0.0
  %1454 = vmatprep.subr.mxu0 0.0
  %1455 = vmatpush1.msra.mxu0 0.0
  %1456 = vmatprep.subr.mxu0 0.0
  %1457 = vmatpush1.msra.mxu0 0.0
  %1458 = vmatprep.subr.mxu0 0.0
  %1459 = vmatpush1.msra.mxu0 0.0
  %1460 = vmatprep.subr.mxu0 0.0
  %1461 = vmatpush1.msra.mxu0 0.0
  %1462 = vmatprep.mubr.f32.mxu0 0.0
  %1463 = vmatmul.mubr.f32.gmra.mrb[0].mxu0 %v1393
  %v1464 = vpop.f32.mrb[0].mxu0
  %v1465 = vadd.f32 %v1384, %v1464
  %v1466 = vpop.f32.mrb[0].mxu0
  %1467 = vmatprep.mubr.f32.mxu0 0.0
  %1468 = vmatmul.mubr.f32.gmra.mrb[0].mxu0 %v1396
  %v1469 = vpop.f32.mrb[0].mxu0
  %v1470 = vadd.f32 %v1389, %v1469
  %v1471 = vpop.f32.mrb[0].mxu0
  %1472 = vdwg.mxu0
  %v1474 = vsel %vm151, %v1080, 0
  %v1477 = vsel %vm151, %v1156, 0
  %1479 = vmatprep.subr.mxu0 0.0
  %1480 = vmatpush1.msra.mxu0 %v27
  %1481 = vmatprep.subr.mxu0 0.0
  %1482 = vmatpush1.msra.mxu0 0.0
  %1483 = vmatprep.subr.mxu0 0.0
  %1484 = vmatpush1.msra.mxu0 0.0
  %1485 = vmatprep.subr.mxu0 0.0
  %1486 = vmatpush1.msra.mxu0 0.0
  %1487 = vmatprep.subr.mxu0 0.0
  %1488 = vmatpush1.msra.mxu0 0.0
  %1489 = vmatprep.subr.mxu0 0.0
  %1490 = vmatpush1.msra.mxu0 0.0
  %1491 = vmatprep.subr.mxu0 0.0
  %1492 = vmatpush1.msra.mxu0 0.0
  %1493 = vmatprep.subr.mxu0 0.0
  %1494 = vmatpush1.msra.mxu0 0.0
  %1495 = vmatprep.subr.mxu0 0.0
  %1496 = vmatpush1.msra.mxu0 0.0
  %1497 = vmatprep.subr.mxu0 0.0
  %1498 = vmatpush1.msra.mxu0 0.0
  %1499 = vmatprep.subr.mxu0 0.0
  %1500 = vmatpush1.msra.mxu0 0.0
  %1501 = vmatprep.subr.mxu0 0.0
  %1502 = vmatpush1.msra.mxu0 0.0
  %1503 = vmatprep.subr.mxu0 0.0
  %1504 = vmatpush1.msra.mxu0 0.0
  %1505 = vmatprep.subr.mxu0 0.0
  %1506 = vmatpush1.msra.mxu0 0.0
  %1507 = vmatprep.subr.mxu0 0.0
  %1508 = vmatpush1.msra.mxu0 0.0
  %1509 = vmatprep.subr.mxu0 0.0
  %1510 = vmatpush1.msra.mxu0 0.0
  %1511 = vmatprep.subr.mxu0 0.0
  %1512 = vmatpush1.msra.mxu0 0.0
  %1513 = vmatprep.subr.mxu0 0.0
  %1514 = vmatpush1.msra.mxu0 0.0
  %1515 = vmatprep.subr.mxu0 0.0
  %1516 = vmatpush1.msra.mxu0 0.0
  %1517 = vmatprep.subr.mxu0 0.0
  %1518 = vmatpush1.msra.mxu0 0.0
  %1519 = vmatprep.subr.mxu0 0.0
  %1520 = vmatpush1.msra.mxu0 0.0
  %1521 = vmatprep.subr.mxu0 0.0
  %1522 = vmatpush1.msra.mxu0 0.0
  %1523 = vmatprep.subr.mxu0 0.0
  %1524 = vmatpush1.msra.mxu0 0.0
  %1525 = vmatprep.subr.mxu0 0.0
  %1526 = vmatpush1.msra.mxu0 0.0
  %1527 = vmatprep.subr.mxu0 0.0
  %1528 = vmatpush1.msra.mxu0 0.0
  %1529 = vmatprep.subr.mxu0 0.0
  %1530 = vmatpush1.msra.mxu0 0.0
  %1531 = vmatprep.subr.mxu0 0.0
  %1532 = vmatpush1.msra.mxu0 0.0
  %1533 = vmatprep.subr.mxu0 0.0
  %1534 = vmatpush1.msra.mxu0 0.0
  %1535 = vmatprep.subr.mxu0 0.0
  %1536 = vmatpush1.msra.mxu0 0.0
  %1537 = vmatprep.subr.mxu0 0.0
  %1538 = vmatpush1.msra.mxu0 0.0
  %1539 = vmatprep.subr.mxu0 0.0
  %1540 = vmatpush1.msra.mxu0 0.0
  %1541 = vmatprep.subr.mxu0 0.0
  %1542 = vmatpush1.msra.mxu0 0.0
  %1543 = vmatprep.mubr.f32.mxu0 0.0
  %1544 = vmatmul.mubr.f32.gmra.mrb[0].mxu0 %v1474
  %v1545 = vpop.f32.mrb[0].mxu0
  %v1546 = vadd.f32 0.0, %v1545
  %v1547 = vpop.f32.mrb[0].mxu0
  %1548 = vmatprep.mubr.f32.mxu0 0.0
  %1549 = vmatmul.mubr.f32.gmra.mrb[0].mxu0 %v1477
  %v1550 = vpop.f32.mrb[0].mxu0
  %v1551 = vadd.f32 0.0, %v1550
  %v1552 = vpop.f32.mrb[0].mxu0
  %1553 = vdwg.mxu0
  %v1554 = vadd.f32 %v1465, %v1546
  %v1555 = vadd.f32 %v1470, %v1551
  %v1557 = vsel %vm151, %v1232, 0
  %v1560 = vsel %vm151, %v1308, 0
  %1562 = vmatprep.subr.mxu0 0.0
  %1563 = vmatpush1.msra.mxu0 %v28
  %1564 = vmatprep.subr.mxu0 0.0
  %1565 = vmatpush1.msra.mxu0 0.0
  %1566 = vmatprep.subr.mxu0 0.0
  %1567 = vmatpush1.msra.mxu0 0.0
  %1568 = vmatprep.subr.mxu0 0.0
  %1569 = vmatpush1.msra.mxu0 0.0
  %1570 = vmatprep.subr.mxu0 0.0
  %1571 = vmatpush1.msra.mxu0 0.0
  %1572 = vmatprep.subr.mxu0 0.0
  %1573 = vmatpush1.msra.mxu0 0.0
  %1574 = vmatprep.subr.mxu0 0.0
  %1575 = vmatpush1.msra.mxu0 0.0
  %1576 = vmatprep.subr.mxu0 0.0
  %1577 = vmatpush1.msra.mxu0 0.0
  %1578 = vmatprep.subr.mxu0 0.0
  %1579 = vmatpush1.msra.mxu0 0.0
  %1580 = vmatprep.subr.mxu0 0.0
  %1581 = vmatpush1.msra.mxu0 0.0
  %1582 = vmatprep.subr.mxu0 0.0
  %1583 = vmatpush1.msra.mxu0 0.0
  %1584 = vmatprep.subr.mxu0 0.0
  %1585 = vmatpush1.msra.mxu0 0.0
  %1586 = vmatprep.subr.mxu0 0.0
  %1587 = vmatpush1.msra.mxu0 0.0
  %1588 = vmatprep.subr.mxu0 0.0
  %1589 = vmatpush1.msra.mxu0 0.0
  %1590 = vmatprep.subr.mxu0 0.0
  %1591 = vmatpush1.msra.mxu0 0.0
  %1592 = vmatprep.subr.mxu0 0.0
  %1593 = vmatpush1.msra.mxu0 0.0
  %1594 = vmatprep.subr.mxu0 0.0
  %1595 = vmatpush1.msra.mxu0 0.0
  %1596 = vmatprep.subr.mxu0 0.0
  %1597 = vmatpush1.msra.mxu0 0.0
  %1598 = vmatprep.subr.mxu0 0.0
  %1599 = vmatpush1.msra.mxu0 0.0
  %1600 = vmatprep.subr.mxu0 0.0
  %1601 = vmatpush1.msra.mxu0 0.0
  %1602 = vmatprep.subr.mxu0 0.0
  %1603 = vmatpush1.msra.mxu0 0.0
  %1604 = vmatprep.subr.mxu0 0.0
  %1605 = vmatpush1.msra.mxu0 0.0
  %1606 = vmatprep.subr.mxu0 0.0
  %1607 = vmatpush1.msra.mxu0 0.0
  %1608 = vmatprep.subr.mxu0 0.0
  %1609 = vmatpush1.msra.mxu0 0.0
  %1610 = vmatprep.subr.mxu0 0.0
  %1611 = vmatpush1.msra.mxu0 0.0
  %1612 = vmatprep.subr.mxu0 0.0
  %1613 = vmatpush1.msra.mxu0 0.0
  %1614 = vmatprep.subr.mxu0 0.0
  %1615 = vmatpush1.msra.mxu0 0.0
  %1616 = vmatprep.subr.mxu0 0.0
  %1617 = vmatpush1.msra.mxu0 0.0
  %1618 = vmatprep.subr.mxu0 0.0
  %1619 = vmatpush1.msra.mxu0 0.0
  %1620 = vmatprep.subr.mxu0 0.0
  %1621 = vmatpush1.msra.mxu0 0.0
  %1622 = vmatprep.subr.mxu0 0.0
  %1623 = vmatpush1.msra.mxu0 0.0
  %1624 = vmatprep.subr.mxu0 0.0
  %1625 = vmatpush1.msra.mxu0 0.0
  %1626 = vmatprep.mubr.f32.mxu0 0.0
  %1627 = vmatmul.mubr.f32.gmra.mrb[0].mxu0 %v1557
  %v1628 = vpop.f32.mrb[0].mxu0
  %v1629 = vadd.f32 0.0, %v1628
  %v1630 = vpop.f32.mrb[0].mxu0
  %1631 = vmatprep.mubr.f32.mxu0 0.0
  %1632 = vmatmul.mubr.f32.gmra.mrb[0].mxu0 %v1560
  %v1633 = vpop.f32.mrb[0].mxu0
  %v1634 = vadd.f32 0.0, %v1633
  %v1635 = vpop.f32.mrb[0].mxu0
  %1636 = vdwg.mxu0
  %v1637 = vadd.f32 %v1554, %v1629
  %v1638 = vadd.f32 %v1555, %v1634
  %v1639 = vlaneseq
  %v1640 = vshrl.u32 %v1639, 7
  %v1641 = vsub.s32 0, %v1640
  %v1642 = vrot.slane %v42, %v1641
  %v1643 = vadd.f32 %v1637, %v1642
  %v1644 = vadd.f32 %v1638, %v1642
  %v1645 = vadd.f32 %v19, %v1643
  %v1646 = vadd.f32 %v20, %v1644
  %v1647 = vsel %vm53, %v1645, 0.0
  %1648 = vadd.xlane.f32.xlu0 %v1647
  %v1649 = vpop.xlane.xlu0 %1648
  %v1650 = vsel %vm53, %v1646, 0.0
  %1651 = vadd.xlane.f32.xlu0 %v1650
  %v1652 = vpop.xlane.xlu0 %1651
  %v1653 = vrcp.pop 32.0
  %v1654 = vmul.f32 %v1649, %v1653
  %v1655 = vmul.f32 %v1652, %v1653
  %v1656 = vsub.f32 %v1645, %v1654
  %v1657 = vsub.f32 %v1646, %v1655
  %v1658 = vmul.f32 %v1656, %v1656
  %v1659 = vmul.f32 %v1657, %v1657
  %v1660 = vsel %vm53, %v1658, 0.0
  %1661 = vadd.xlane.f32.xlu0 %v1660
  %v1662 = vpop.xlane.xlu0 %1661
  %v1663 = vsel %vm53, %v1659, 0.0
  %1664 = vadd.xlane.f32.xlu0 %v1663
  %v1665 = vpop.xlane.xlu0 %1664
  %v1666 = vmul.f32 %v1662, %v1653
  %v1667 = vmul.f32 %v1665, %v1653
  %v1668 = vadd.f32 %v1666, 1e-05
  %v1669 = vadd.f32 %v1667, 1e-05
  %v1670 = vrsqrt.pop %v1668
  %v1671 = vrsqrt.pop %v1669
  %v1672 = vmul.f32 %v1656, %v1670
  %v1673 = vmul.f32 %v1657, %v1671
  %v1674 = vlaneseq
  %v1675 = vshrl.u32 %v1674, 7
  %v1676 = vsub.s32 0, %v1675
  %v1677 = vrot.slane %v45, %v1676
  %v1678 = vmul.f32 %v1672, %v1677
  %v1679 = vmul.f32 %v1673, %v1677
  %v1680 = vlaneseq
  %v1681 = vshrl.u32 %v1680, 7
  %v1682 = vsub.s32 0, %v1681
  %v1683 = vrot.slane %v46, %v1682
  %v1684 = vadd.f32 %v1678, %v1683
  %v1685 = vadd.f32 %v1679, %v1683
  %v1686 = vlaneseq
  %v1687 = vshrl.u32 %v1686, 7
  %v1688 = vsub.s32 0, %v1687
  %v1689 = vrot.slane %v43, %v1688
  %v1691 = vsel %vm53, %v1684, 0
  %v1694 = vsel %vm53, %v1685, 0
  %1696 = vmatprep.subr.mxu0 0.0
  %1697 = vmatpush1.msra.mxu0 %v29
  %1698 = vmatprep.subr.mxu0 0.0
  %1699 = vmatpush1.msra.mxu0 %v30
  %1700 = vmatprep.subr.mxu0 0.0
  %1701 = vmatpush1.msra.mxu0 %v31
  %1702 = vmatprep.subr.mxu0 0.0
  %1703 = vmatpush1.msra.mxu0 %v32
  %1704 = vmatprep.subr.mxu0 0.0
  %1705 = vmatpush1.msra.mxu0 0.0
  %1706 = vmatprep.subr.mxu0 0.0
  %1707 = vmatpush1.msra.mxu0 0.0
  %1708 = vmatprep.subr.mxu0 0.0
  %1709 = vmatpush1.msra.mxu0 0.0
  %1710 = vmatprep.subr.mxu0 0.0
  %1711 = vmatpush1.msra.mxu0 0.0
  %1712 = vmatprep.subr.mxu0 0.0
  %1713 = vmatpush1.msra.mxu0 0.0
  %1714 = vmatprep.subr.mxu0 0.0
  %1715 = vmatpush1.msra.mxu0 0.0
  %1716 = vmatprep.subr.mxu0 0.0
  %1717 = vmatpush1.msra.mxu0 0.0
  %1718 = vmatprep.subr.mxu0 0.0
  %1719 = vmatpush1.msra.mxu0 0.0
  %1720 = vmatprep.subr.mxu0 0.0
  %1721 = vmatpush1.msra.mxu0 0.0
  %1722 = vmatprep.subr.mxu0 0.0
  %1723 = vmatpush1.msra.mxu0 0.0
  %1724 = vmatprep.subr.mxu0 0.0
  %1725 = vmatpush1.msra.mxu0 0.0
  %1726 = vmatprep.subr.mxu0 0.0
  %1727 = vmatpush1.msra.mxu0 0.0
  %1728 = vmatprep.subr.mxu0 0.0
  %1729 = vmatpush1.msra.mxu0 0.0
  %1730 = vmatprep.subr.mxu0 0.0
  %1731 = vmatpush1.msra.mxu0 0.0
  %1732 = vmatprep.subr.mxu0 0.0
  %1733 = vmatpush1.msra.mxu0 0.0
  %1734 = vmatprep.subr.mxu0 0.0
  %1735 = vmatpush1.msra.mxu0 0.0
  %1736 = vmatprep.subr.mxu0 0.0
  %1737 = vmatpush1.msra.mxu0 0.0
  %1738 = vmatprep.subr.mxu0 0.0
  %1739 = vmatpush1.msra.mxu0 0.0
  %1740 = vmatprep.subr.mxu0 0.0
  %1741 = vmatpush1.msra.mxu0 0.0
  %1742 = vmatprep.subr.mxu0 0.0
  %1743 = vmatpush1.msra.mxu0 0.0
  %1744 = vmatprep.subr.mxu0 0.0
  %1745 = vmatpush1.msra.mxu0 0.0
  %1746 = vmatprep.subr.mxu0 0.0
  %1747 = vmatpush1.msra.mxu0 0.0
  %1748 = vmatprep.subr.mxu0 0.0
  %1749 = vmatpush1.msra.mxu0 0.0
  %1750 = vmatprep.subr.mxu0 0.0
  %1751 = vmatpush1.msra.mxu0 0.0
  %1752 = vmatprep.subr.mxu0 0.0
  %1753 = vmatpush1.msra.mxu0 0.0
  %1754 = vmatprep.subr.mxu0 0.0
  %1755 = vmatpush1.msra.mxu0 0.0
  %1756 = vmatprep.subr.mxu0 0.0
  %1757 = vmatpush1.msra.mxu0 0.0
  %1758 = vmatprep.subr.mxu0 0.0
  %1759 = vmatpush1.msra.mxu0 0.0
  %1760 = vmatprep.mubr.f32.mxu0 0.0
  %1761 = vmatmul.mubr.f32.gmra.mrb[0].mxu0 %v1691
  %v1762 = vpop.f32.mrb[0].mxu0
  %v1763 = vadd.f32 %v1689, %v1762
  %v1764 = vpop.f32.mrb[0].mxu0
  %1765 = vmatprep.mubr.f32.mxu0 0.0
  %1766 = vmatmul.mubr.f32.gmra.mrb[0].mxu0 %v1694
  %v1767 = vpop.f32.mrb[0].mxu0
  %v1768 = vadd.f32 %v1689, %v1767
  %v1769 = vpop.f32.mrb[0].mxu0
  %1770 = vdwg.mxu0
  %v1771 = vmax.f32 %v1763, 0.0
  %v1772 = vmax.f32 %v1768, 0.0
  %v1773 = vlaneseq
  %v1774 = vshrl.u32 %v1773, 7
  %v1775 = vsub.s32 0, %v1774
  %v1776 = vrot.slane %v44, %v1775
  %vm1777 = vcmask 523264
  %v1779 = vsel %vm1777, %v1771, 0
  %v1782 = vsel %vm1777, %v1772, 0
  %1784 = vmatprep.subr.mxu0 0.0
  %1785 = vmatpush1.msra.mxu0 %v33
  %1786 = vmatprep.subr.mxu0 0.0
  %1787 = vmatpush1.msra.mxu0 %v34
  %1788 = vmatprep.subr.mxu0 0.0
  %1789 = vmatpush1.msra.mxu0 %v35
  %1790 = vmatprep.subr.mxu0 0.0
  %1791 = vmatpush1.msra.mxu0 %v36
  %1792 = vmatprep.subr.mxu0 0.0
  %1793 = vmatpush1.msra.mxu0 %v37
  %1794 = vmatprep.subr.mxu0 0.0
  %1795 = vmatpush1.msra.mxu0 %v38
  %1796 = vmatprep.subr.mxu0 0.0
  %1797 = vmatpush1.msra.mxu0 %v39
  %1798 = vmatprep.subr.mxu0 0.0
  %1799 = vmatpush1.msra.mxu0 %v40
  %1800 = vmatprep.subr.mxu0 0.0
  %1801 = vmatpush1.msra.mxu0 0.0
  %1802 = vmatprep.subr.mxu0 0.0
  %1803 = vmatpush1.msra.mxu0 0.0
  %1804 = vmatprep.subr.mxu0 0.0
  %1805 = vmatpush1.msra.mxu0 0.0
  %1806 = vmatprep.subr.mxu0 0.0
  %1807 = vmatpush1.msra.mxu0 0.0
  %1808 = vmatprep.subr.mxu0 0.0
  %1809 = vmatpush1.msra.mxu0 0.0
  %1810 = vmatprep.subr.mxu0 0.0
  %1811 = vmatpush1.msra.mxu0 0.0
  %1812 = vmatprep.subr.mxu0 0.0
  %1813 = vmatpush1.msra.mxu0 0.0
  %1814 = vmatprep.subr.mxu0 0.0
  %1815 = vmatpush1.msra.mxu0 0.0
  %1816 = vmatprep.subr.mxu0 0.0
  %1817 = vmatpush1.msra.mxu0 0.0
  %1818 = vmatprep.subr.mxu0 0.0
  %1819 = vmatpush1.msra.mxu0 0.0
  %1820 = vmatprep.subr.mxu0 0.0
  %1821 = vmatpush1.msra.mxu0 0.0
  %1822 = vmatprep.subr.mxu0 0.0
  %1823 = vmatpush1.msra.mxu0 0.0
  %1824 = vmatprep.subr.mxu0 0.0
  %1825 = vmatpush1.msra.mxu0 0.0
  %1826 = vmatprep.subr.mxu0 0.0
  %1827 = vmatpush1.msra.mxu0 0.0
  %1828 = vmatprep.subr.mxu0 0.0
  %1829 = vmatpush1.msra.mxu0 0.0
  %1830 = vmatprep.subr.mxu0 0.0
  %1831 = vmatpush1.msra.mxu0 0.0
  %1832 = vmatprep.subr.mxu0 0.0
  %1833 = vmatpush1.msra.mxu0 0.0
  %1834 = vmatprep.subr.mxu0 0.0
  %1835 = vmatpush1.msra.mxu0 0.0
  %1836 = vmatprep.subr.mxu0 0.0
  %1837 = vmatpush1.msra.mxu0 0.0
  %1838 = vmatprep.subr.mxu0 0.0
  %1839 = vmatpush1.msra.mxu0 0.0
  %1840 = vmatprep.subr.mxu0 0.0
  %1841 = vmatpush1.msra.mxu0 0.0
  %1842 = vmatprep.subr.mxu0 0.0
  %1843 = vmatpush1.msra.mxu0 0.0
  %1844 = vmatprep.subr.mxu0 0.0
  %1845 = vmatpush1.msra.mxu0 0.0
  %1846 = vmatprep.subr.mxu0 0.0
  %1847 = vmatpush1.msra.mxu0 0.0
  %1848 = vmatprep.mubr.f32.mxu0 0.0
  %1849 = vmatmul.mubr.f32.gmra.mrb[0].mxu0 %v1779
  %v1850 = vpop.f32.mrb[0].mxu0
  %v1851 = vadd.f32 %v1776, %v1850
  %v1852 = vpop.f32.mrb[0].mxu0
  %1853 = vmatprep.mubr.f32.mxu0 0.0
  %1854 = vmatmul.mubr.f32.gmra.mrb[0].mxu0 %v1782
  %v1855 = vpop.f32.mrb[0].mxu0
  %v1856 = vadd.f32 %v1776, %v1855
  %v1857 = vpop.f32.mrb[0].mxu0
  %1858 = vdwg.mxu0
  %v1859 = vadd.f32 %v1684, %v1851
  %v1860 = vadd.f32 %v1685, %v1856
  %v1861 = vsel %vm53, %v1859, 0.0
  %1862 = vadd.xlane.f32.xlu0 %v1861
  %v1863 = vpop.xlane.xlu0 %1862
  %v1864 = vsel %vm53, %v1860, 0.0
  %1865 = vadd.xlane.f32.xlu0 %v1864
  %v1866 = vpop.xlane.xlu0 %1865
  %v1867 = vmul.f32 %v1863, %v1653
  %v1868 = vmul.f32 %v1866, %v1653
  %v1869 = vsub.f32 %v1859, %v1867
  %v1870 = vsub.f32 %v1860, %v1868
  %v1871 = vmul.f32 %v1869, %v1869
  %v1872 = vmul.f32 %v1870, %v1870
  %v1873 = vsel %vm53, %v1871, 0.0
  %1874 = vadd.xlane.f32.xlu0 %v1873
  %v1875 = vpop.xlane.xlu0 %1874
  %v1876 = vsel %vm53, %v1872, 0.0
  %1877 = vadd.xlane.f32.xlu0 %v1876
  %v1878 = vpop.xlane.xlu0 %1877
  %v1879 = vmul.f32 %v1875, %v1653
  %v1880 = vmul.f32 %v1878, %v1653
  %v1881 = vadd.f32 %v1879, 1e-05
  %v1882 = vadd.f32 %v1880, 1e-05
  %v1883 = vrsqrt.pop %v1881
  %v1884 = vrsqrt.pop %v1882
  %v1885 = vmul.f32 %v1869, %v1883
  %v1886 = vmul.f32 %v1870, %v1884
  %v1887 = vlaneseq
  %v1888 = vshrl.u32 %v1887, 7
  %v1889 = vsub.s32 0, %v1888
  %v1890 = vrot.slane %v47, %v1889
  %v1891 = vmul.f32 %v1885, %v1890
  %v1892 = vmul.f32 %v1886, %v1890
  %v1893 = vlaneseq
  %v1894 = vshrl.u32 %v1893, 7
  %v1895 = vsub.s32 0, %v1894
  %v1896 = vrot.slane %v48, %v1895
  %v1897 = vadd.f32 %v1891, %v1896
  %v1898 = vadd.f32 %v1892, %v1896
  %1899 = vst.msk [vmem:[%s4] sm:$0xff] %vm53, %v1897
  %1900 = vst.msk [vmem:[%s4 + $0x8] sm:$0xff] %vm53, %v1898
  // Predicated region
  $region18: #{transformer_encoder_layer.1} parent=0 // pred_check
    _
  $region19: #{transformer_encoder_layer.1} parent=0 // pred_check_branch
    %1902 = sbr.rel (0) target = $region21
  $region20: #{transformer_encoder_layer.1} parent=0 // pred_region
    _
  $region21: #{transformer_encoder_layer.1} parent=0 // pred_fallthru
    _
  // Predicated region
  $region22: #{transformer_encoder_layer.1} parent=0 // pred_check
    _
  $region23: #{transformer_encoder_layer.1} parent=0 // pred_check_branch
    %1904 = sbr.rel (0) target = $region25
  $region24: #{transformer_encoder_layer.1} parent=0 // pred_region
    _
  $region25: #{transformer_encoder_layer.1} parent=0 // pred_fallthru
    _
  // Predicated region
  $region26: #{transformer_encoder_layer.1} parent=0 // pred_check
    _
  $region27: #{transformer_encoder_layer.1} parent=0 // pred_check_branch
    %1906 = sbr.rel (0) target = $region29
  $region28: #{transformer_encoder_layer.1} parent=0 // pred_region
    _
  $region29: #{transformer_encoder_layer.1} parent=0 // pred_fallthru
    _
  // Predicated region
  $region30: #{transformer_encoder_layer.1} parent=0 // pred_check
    _
  $region31: #{transformer_encoder_layer.1} parent=0 // pred_check_branch
    %1908 = sbr.rel (0) target = $region33
  $region32: #{transformer_encoder_layer.1} parent=0 // pred_region
    _
  $region33: #{transformer_encoder_layer.1} parent=0 // pred_fallthru
    _

</llo_original>
